<compile_context>
chip_gen: v5e
topology: v5e:2x2
jax: 0.10.0
libtpu: 0.0.40
codegen_flags: <defaults>
</compile_context>

<pallas_src>
import functools

import jax
import jax.numpy as jnp
from jax.experimental import pallas as pl
from jax.experimental.pallas import tpu as pltpu

NEG_SLOPE = 0.2      # LeakyReLU(0.2)
L2_EPS = 1e-12       # torch.nn.functional.normalize eps
LANE = 128


def _ceil_to(x, m):
    return ((x + m - 1) // m) * m


def _pad2(x, rows, cols):
    r, c = x.shape
    if r == rows and c == cols:
        return x
    return jnp.pad(x, ((0, rows - r), (0, cols - c)))


def ngcf_side_kernel(x_self_ref, adj_ref, x_nbr_ref, w1_ref, w2_ref, b_ref, out_ref,
                     acc_ref, *, transpose_adj):
    """One (dst-row-tile, contraction-tile) grid step for one node type."""
    k = pl.program_id(1)

    @pl.when(k == 0)
    def _init():
        acc_ref[...] = jnp.zeros_like(acc_ref)

    # Edge-weighted neighbor aggregation: acc += A_w[row_tile, k_tile] @ x_nbr[k_tile, :]
    if transpose_adj:
        # Adjacency block is [tile_k(src), tile_rows(dst)]; contract over dim 0 of both
        # operands (A_w^T @ x_nbr) so no transposed adjacency copy is needed in HBM.
        acc_ref[...] += jax.lax.dot_general(
            adj_ref[...], x_nbr_ref[...],
            dimension_numbers=(((0,), (0,)), ((), ())),
            preferred_element_type=jnp.float32)
    else:
        acc_ref[...] += jnp.dot(adj_ref[...], x_nbr_ref[...],
                                preferred_element_type=jnp.float32)

    @pl.when(k == pl.num_programs(1) - 1)
    def _finalize():
        x_self = x_self_ref[...].astype(jnp.float32)
        agg = acc_ref[...]
        # NGCF edge norms factorize (norm_edge = norm_self * norm_nbr), so the
        # copy_e_sum(u_mul_v(...)) message collapses exactly to x_self * agg.
        sum_feats = (x_self + agg).astype(w1_ref.dtype)
        msg_feats = (x_self * agg).astype(w2_ref.dtype)
        # Fused projection: (x+agg) @ W1 + (x*agg) @ W2 + (b1 + b2), f32 accumulation.
        h = (jnp.dot(sum_feats, w1_ref[...], preferred_element_type=jnp.float32)
             + jnp.dot(msg_feats, w2_ref[...], preferred_element_type=jnp.float32)
             + b_ref[...])
        # LeakyReLU(0.2) == max(h, 0.2*h) for slope in (0, 1).
        h = jnp.maximum(h, NEG_SLOPE * h)
        # TODO(synk): nn.Dropout is identity in eval mode; training-time dropout not applied.
        # F.normalize(h, dim=1, p=2) == h * rsqrt(max(sum(h^2), eps^2))
        ssq = jnp.sum(h * h, axis=-1, keepdims=True)
        out_ref[...] = h * jax.lax.rsqrt(jnp.maximum(ssq, L2_EPS * L2_EPS))


def ngcf_side(x_self, x_nbr, adj_w, w1_p, w2_p, bias, *,
              transpose_adj, tile_rows=256, tile_k=512):
    """Run one node-type side.

    x_self:   [n_dst, d_in_p]  (bf16, lane-padded)
    x_nbr:    [n_src, d_in_p]
    adj_w:    [n_dst, n_src] edge-normalized adjacency, or [n_src, n_dst] if transpose_adj
    w1_p/w2_p:[d_in_p, d_out_p] (bf16), bias: [1, d_out_p] = b1+b2 (f32)
    """
    n_dst, d_in_p = x_self.shape
    n_src = x_nbr.shape[0]
    d_out_p = w1_p.shape[1]

    tile_rows = min(tile_rows, _ceil_to(n_dst, LANE))
    tile_k = min(tile_k, _ceil_to(n_src, LANE))
    n_dst_p = _ceil_to(n_dst, tile_rows)
    n_src_p = _ceil_to(n_src, tile_k)

    x_self_p = _pad2(x_self, n_dst_p, d_in_p)
    x_nbr_p = _pad2(x_nbr, n_src_p, d_in_p)
    if transpose_adj:
        adj_p = _pad2(adj_w, n_src_p, n_dst_p)
        adj_spec = pl.BlockSpec((tile_k, tile_rows), lambda i, k: (k, i))
    else:
        adj_p = _pad2(adj_w, n_dst_p, n_src_p)
        adj_spec = pl.BlockSpec((tile_rows, tile_k), lambda i, k: (i, k))

    out = pl.pallas_call(
        functools.partial(ngcf_side_kernel, transpose_adj=transpose_adj),
        out_shape=jax.ShapeDtypeStruct((n_dst_p, d_out_p), jnp.float32),
        grid_spec=pltpu.PrefetchScalarGridSpec(
            num_scalar_prefetch=0,
            grid=(n_dst_p // tile_rows, n_src_p // tile_k),
            in_specs=[
                pl.BlockSpec((tile_rows, d_in_p), lambda i, k: (i, 0)),   # x_self
                adj_spec,                                                 # A_w tile
                pl.BlockSpec((tile_k, d_in_p), lambda i, k: (k, 0)),      # x_nbr
                pl.BlockSpec((d_in_p, d_out_p), lambda i, k: (0, 0)),     # W1
                pl.BlockSpec((d_in_p, d_out_p), lambda i, k: (0, 0)),     # W2
                pl.BlockSpec((1, d_out_p), lambda i, k: (0, 0)),          # b1 + b2
            ],
            out_specs=pl.BlockSpec((tile_rows, d_out_p), lambda i, k: (i, 0)),
            scratch_shapes=[pltpu.VMEM((tile_rows, d_in_p), jnp.float32)],
        ),
        compiler_params=pltpu.CompilerParams(
            dimension_semantics=("parallel", "arbitrary")),
    )(x_self_p, adj_p, x_nbr_p, w1_p, w2_p, bias)
    return out[:n_dst]


def ngcf_layer_forward(feat_user, feat_item, adj, norm_user, norm_item,
                       w1, b1, w2, b2):
    """Full NGCF layer forward for both node types (eval-mode semantics).

    adj: [N_user, N_item] binary adjacency; norm_user [N_user,1] / norm_item [N_item,1]
    are the NGCF deg^{-1/2} node norms (per-edge norms factorize as their product).
    w1/w2 are pre-transposed Linear weights [d_in, d_out]; b1/b2 are [1, d_out].
    """
    n_user, d_in = feat_user.shape
    n_item = feat_item.shape[0]
    d_out = w1.shape[1]
    d_in_p = _ceil_to(d_in, LANE)
    d_out_p = _ceil_to(d_out, LANE)

    # One-time host prep: edge-normalized adjacency diag(n_u) A diag(n_i) in bf16,
    # lane-padded bf16 features, lane-padded bf16 projection weights, pre-summed bias.
    adj_w = (adj * norm_user * norm_item.T).astype(jnp.bfloat16)       # [N_user, N_item]
    xu = _pad2(feat_user, n_user, d_in_p).astype(jnp.bfloat16)
    xi = _pad2(feat_item, n_item, d_in_p).astype(jnp.bfloat16)
    w1_p = _pad2(w1, d_in_p, d_out_p).astype(jnp.bfloat16)              # [d_in_p, d_out_p]
    w2_p = _pad2(w2, d_in_p, d_out_p).astype(jnp.bfloat16)              # [d_in_p, d_out_p]
    bias = _pad2(b1 + b2, 1, d_out_p).astype(jnp.float32)               # [1, d_out_p]

    h_user = ngcf_side(xu, xi, adj_w, w1_p, w2_p, bias, transpose_adj=False)
    h_item = ngcf_side(xi, xu, adj_w, w1_p, w2_p, bias, transpose_adj=True)
    return {"user": h_user[:, :d_out], "item": h_item[:, :d_out]}


def ngcf_reference(feat_user, feat_item, adj, norm_user, norm_item, w1, b1, w2, b2):
    """Pure-JAX f32 reference following the original (two-matmul) DGL math."""
    edge_norm = adj * norm_user * norm_item.T

    def side(x_self, x_nbr, a_w, a_bin, n_self, n_nbr):
        agg = a_w @ x_nbr
        msg = (x_self * n_self) * (a_bin @ (x_nbr * n_nbr))
        h = (x_self + agg) @ w1 + b1 + msg @ w2 + b2
        h = jnp.where(h >= 0, h, NEG_SLOPE * h)
        nrm = jnp.sqrt(jnp.sum(h * h, axis=1, keepdims=True))
        return h / jnp.maximum(nrm, L2_EPS)

    return {
        "user": side(feat_user, feat_item, edge_norm, adj, norm_user, norm_item),
        "item": side(feat_item, feat_user, edge_norm.T, adj.T, norm_item, norm_user),
    }


def xavier_uniform(key, fan_in, fan_out):
    bound = jnp.sqrt(6.0 / (fan_in + fan_out))
    # Generated directly in [in, out] (transposed) layout for x @ W.
    return jax.random.uniform(key, (fan_in, fan_out), jnp.float32, -bound, bound)


if __name__ == "__main__":
    key = jax.random.PRNGKey(0)
    k_adj, k_fu, k_fi, k_w1, k_w2 = jax.random.split(key, 5)

    # Deliberately non-multiple-of-128 node counts to exercise the padding path.
    N_USER, N_ITEM = 100, 72
    D_IN, D_OUT = 32, 32

    adj = jax.random.bernoulli(k_adj, 0.15, (N_USER, N_ITEM)).astype(jnp.float32)
    feat_user = jax.random.normal(k_fu, (N_USER, D_IN), jnp.float32)
    feat_item = jax.random.normal(k_fi, (N_ITEM, D_IN), jnp.float32)

    # NGCF norms: node norm = deg^{-1/2}; edge norm = norm_user * norm_item (factorized).
    deg_u = jnp.maximum(adj.sum(axis=1, keepdims=True), 1.0)    # [N_user, 1]
    deg_i = jnp.maximum(adj.sum(axis=0, keepdims=True), 1.0)    # [1, N_item]
    norm_user = 1.0 / jnp.sqrt(deg_u)                           # [N_user, 1]
    norm_item = (1.0 / jnp.sqrt(deg_i)).T                       # [N_item, 1]

    # Parameters: xavier_uniform weights (pre-transposed [in, out]), zero bias.
    w1 = xavier_uniform(k_w1, D_IN, D_OUT)
    w2 = xavier_uniform(k_w2, D_IN, D_OUT)
    b1 = jnp.zeros((1, D_OUT), jnp.float32)
    b2 = jnp.zeros((1, D_OUT), jnp.float32)

    out = jax.jit(ngcf_layer_forward)(feat_user, feat_item, adj,
                                      norm_user, norm_item, w1, b1, w2, b2)
    jax.block_until_ready(out)

    assert out["user"].shape == (N_USER, D_OUT)
    assert out["item"].shape == (N_ITEM, D_OUT)
    assert bool(jnp.all(jnp.isfinite(out["user"])))
    assert bool(jnp.all(jnp.isfinite(out["item"])))

    # Cross-check against the f32 reference (loose tolerance for bf16 MXU inputs).
    ref = ngcf_reference(feat_user, feat_item, adj, norm_user, norm_item, w1, b1, w2, b2)
    err_u = float(jnp.max(jnp.abs(out["user"] - ref["user"])))
    err_i = float(jnp.max(jnp.abs(out["item"] - ref["item"])))
    assert err_u < 1e-1 and err_i < 1e-1, (err_u, err_i)

    print("KERNEL_OK")
</pallas_src>

<mosaic_0001>
module attributes {stable_mosaic.version = 11 : i64} {
  func.func @ngcf_side_kernel(%arg0: i32, %arg1: i32, %arg2: memref<128x128xbf16, #tpu.memory_space<vmem>>, %arg3: memref<128x128xbf16, #tpu.memory_space<vmem>>, %arg4: memref<128x128xbf16, #tpu.memory_space<vmem>>, %arg5: memref<128x128xbf16, #tpu.memory_space<vmem>>, %arg6: memref<128x128xbf16, #tpu.memory_space<vmem>>, %arg7: memref<1x128xf32, #tpu.memory_space<vmem>>, %arg8: memref<128x128xf32, #tpu.memory_space<vmem>>, %arg9: memref<128x128xf32, #tpu.memory_space<vmem>>) attributes {dimension_semantics = [#tpu.dimension_semantics<parallel>, #tpu.dimension_semantics<arbitrary>], iteration_bounds = array<i64: 1, 1>, scalar_prefetch = 0 : i64, scratch_operands = 1 : i64, tpu.core_type = #tpu.core_type<tc>, window_params = [{transform_indices = @transform_0, window_bounds = array<i64: 128, 128>}, {transform_indices = @transform_1, window_bounds = array<i64: 128, 128>}, {transform_indices = @transform_2, window_bounds = array<i64: 128, 128>}, {pipeline_mode = #tpu.pipeline_mode<synchronous>, transform_indices = @transform_3, window_bounds = array<i64: 128, 128>}, {pipeline_mode = #tpu.pipeline_mode<synchronous>, transform_indices = @transform_4, window_bounds = array<i64: 128, 128>}, {pipeline_mode = #tpu.pipeline_mode<synchronous>, transform_indices = @transform_5, window_bounds = array<i64: 1, 128>}, {transform_indices = @transform_6, window_bounds = array<i64: 128, 128>}]} {
    %c0_i32 = arith.constant 0 : i32
    %0 = arith.cmpi eq, %arg1, %c0_i32 : i32
    %1 = arith.extui %0 : i1 to i32
    %c0_i32_0 = arith.constant 0 : i32
    %2 = arith.cmpi ne, %1, %c0_i32_0 : i32
    scf.if %2 {
      %cst_10 = arith.constant 0.000000e+00 : f32
      %12 = vector.broadcast %cst_10 : f32 to vector<128x128xf32>
      %c0_11 = arith.constant 0 : index
      %c0_12 = arith.constant 0 : index
      %13 = vector.load %arg9[%c0_11, %c0_12] : memref<128x128xf32, #tpu.memory_space<vmem>>, vector<128x128xf32>
      tpu.vector_store %arg9[%c0_11, %c0_12], %12 {strides = array<i32>} : memref<128x128xf32, #tpu.memory_space<vmem>>, vector<128x128xf32>,
    } else {
    }
    %c0 = arith.constant 0 : index
    %c0_1 = arith.constant 0 : index
    %3 = vector.load %arg9[%c0, %c0_1] : memref<128x128xf32, #tpu.memory_space<vmem>>, vector<128x128xf32>
    %c0_2 = arith.constant 0 : index
    %c0_3 = arith.constant 0 : index
    %4 = vector.load %arg3[%c0_2, %c0_3] : memref<128x128xbf16, #tpu.memory_space<vmem>>, vector<128x128xbf16>
    %c0_4 = arith.constant 0 : index
    %c0_5 = arith.constant 0 : index
    %5 = vector.load %arg4[%c0_4, %c0_5] : memref<128x128xbf16, #tpu.memory_space<vmem>>, vector<128x128xbf16>
    %cst = arith.constant dense<0.000000e+00> : vector<128x128xf32>
    %6 = tpu.matmul %4, %5, %cst {dimension_numbers = #tpu.dot_dimension_numbers<[0], [0], [1], [1], [0, 1, 1, 1], [], []>} : vector<128x128xbf16>, vector<128x128xbf16>, vector<128x128xf32> -> vector<128x128xf32>
    %7 = arith.addf %3, %6 : vector<128x128xf32>
    %c0_6 = arith.constant 0 : index
    %c0_7 = arith.constant 0 : index
    %8 = vector.load %arg9[%c0_6, %c0_7] : memref<128x128xf32, #tpu.memory_space<vmem>>, vector<128x128xf32>
    tpu.vector_store %arg9[%c0_6, %c0_7], %7 {strides = array<i32>} : memref<128x128xf32, #tpu.memory_space<vmem>>, vector<128x128xf32>,
    %c0_i32_8 = arith.constant 0 : i32
    %9 = arith.cmpi eq, %arg1, %c0_i32_8 : i32
    %10 = arith.extui %9 : i1 to i32
    %c0_i32_9 = arith.constant 0 : i32
    %11 = arith.cmpi ne, %10, %c0_i32_9 : i32
    scf.if %11 {
      %c0_10 = arith.constant 0 : index
      %c0_11 = arith.constant 0 : index
      %12 = vector.load %arg2[%c0_10, %c0_11] : memref<128x128xbf16, #tpu.memory_space<vmem>>, vector<128x128xbf16>
      %13 = arith.extf %12 : vector<128x128xbf16> to vector<128x128xf32>
      %c0_12 = arith.constant 0 : index
      %c0_13 = arith.constant 0 : index
      %14 = vector.load %arg9[%c0_12, %c0_13] : memref<128x128xf32, #tpu.memory_space<vmem>>, vector<128x128xf32>
      %15 = arith.addf %13, %14 : vector<128x128xf32>
      %16 = arith.truncf %15 : vector<128x128xf32> to vector<128x128xbf16>
      %17 = arith.mulf %13, %14 : vector<128x128xf32>
      %18 = arith.truncf %17 : vector<128x128xf32> to vector<128x128xbf16>
      %c0_14 = arith.constant 0 : index
      %c0_15 = arith.constant 0 : index
      %19 = vector.load %arg5[%c0_14, %c0_15] : memref<128x128xbf16, #tpu.memory_space<vmem>>, vector<128x128xbf16>
      %cst_16 = arith.constant dense<0.000000e+00> : vector<128x128xf32>
      %20 = tpu.matmul %16, %19, %cst_16 {dimension_numbers = #tpu.dot_dimension_numbers<[1], [0], [0], [1], [0, 0, 1, 1], [], []>} : vector<128x128xbf16>, vector<128x128xbf16>, vector<128x128xf32> -> vector<128x128xf32>
      %c0_17 = arith.constant 0 : index
      %c0_18 = arith.constant 0 : index
      %21 = vector.load %arg6[%c0_17, %c0_18] : memref<128x128xbf16, #tpu.memory_space<vmem>>, vector<128x128xbf16>
      %cst_19 = arith.constant dense<0.000000e+00> : vector<128x128xf32>
      %22 = tpu.matmul %18, %21, %cst_19 {dimension_numbers = #tpu.dot_dimension_numbers<[1], [0], [0], [1], [0, 0, 1, 1], [], []>} : vector<128x128xbf16>, vector<128x128xbf16>, vector<128x128xf32> -> vector<128x128xf32>
      %23 = arith.addf %20, %22 : vector<128x128xf32>
      %c0_20 = arith.constant 0 : index
      %c0_21 = arith.constant 0 : index
      %24 = vector.load %arg7[%c0_20, %c0_21] : memref<1x128xf32, #tpu.memory_space<vmem>>, vector<1x128xf32>
      %25 = vector.broadcast %24 : vector<1x128xf32> to vector<128x128xf32>
      %26 = arith.addf %23, %25 : vector<128x128xf32>
      %cst_22 = arith.constant 2.000000e-01 : f32
      %27 = vector.broadcast %cst_22 : f32 to vector<128x128xf32>
      %28 = arith.mulf %27, %26 : vector<128x128xf32>
      %29 = arith.maximumf %26, %28 : vector<128x128xf32>
      %30 = arith.mulf %29, %29 : vector<128x128xf32>
      %cst_23 = arith.constant dense<0.000000e+00> : vector<128xf32>
      %31 = vector.multi_reduction <add>, %30, %cst_23 [1] : vector<128x128xf32> to vector<128xf32>
      %32 = vector.shape_cast %31 : vector<128xf32> to vector<128x1xf32>
      %cst_24 = arith.constant 1.000000e-24 : f32
      %33 = vector.broadcast %cst_24 : f32 to vector<128x1xf32>
      %34 = arith.maximumf %32, %33 : vector<128x1xf32>
      %35 = math.rsqrt %34 : vector<128x1xf32>
      %36 = vector.broadcast %35 : vector<128x1xf32> to vector<128x128xf32>
      %37 = arith.mulf %29, %36 : vector<128x128xf32>
      %c0_25 = arith.constant 0 : index
      %c0_26 = arith.constant 0 : index
      %38 = vector.load %arg8[%c0_25, %c0_26] : memref<128x128xf32, #tpu.memory_space<vmem>>, vector<128x128xf32>
      tpu.vector_store %arg8[%c0_25, %c0_26], %37 {strides = array<i32>} : memref<128x128xf32, #tpu.memory_space<vmem>>, vector<128x128xf32>,
    } else {
    }
    return
  }
  func.func @transform_0(%arg0: i32, %arg1: i32) -> (i32, i32) {
    %c0_i32 = arith.constant 0 : i32
    %c0_i32_0 = arith.constant 0 : i32
    return %arg0, %c0_i32 : i32, i32
  }
  func.func @transform_1(%arg0: i32, %arg1: i32) -> (i32, i32) {
    %c0_i32 = arith.constant 0 : i32
    return %arg1, %arg0 : i32, i32
  }
  func.func @transform_2(%arg0: i32, %arg1: i32) -> (i32, i32) {
    %c0_i32 = arith.constant 0 : i32
    %c0_i32_0 = arith.constant 0 : i32
    return %arg1, %c0_i32 : i32, i32
  }
  func.func @transform_3(%arg0: i32, %arg1: i32) -> (i32, i32) {
    %c0_i32 = arith.constant 0 : i32
    %c0_i32_0 = arith.constant 0 : i32
    %c0_i32_1 = arith.constant 0 : i32
    return %c0_i32, %c0_i32_0 : i32, i32
  }
  func.func @transform_4(%arg0: i32, %arg1: i32) -> (i32, i32) {
    %c0_i32 = arith.constant 0 : i32
    %c0_i32_0 = arith.constant 0 : i32
    %c0_i32_1 = arith.constant 0 : i32
    return %c0_i32, %c0_i32_0 : i32, i32
  }
  func.func @transform_5(%arg0: i32, %arg1: i32) -> (i32, i32) {
    %c0_i32 = arith.constant 0 : i32
    %c0_i32_0 = arith.constant 0 : i32
    %c0_i32_1 = arith.constant 0 : i32
    return %c0_i32, %c0_i32_0 : i32, i32
  }
  func.func @transform_6(%arg0: i32, %arg1: i32) -> (i32, i32) {
    %c0_i32 = arith.constant 0 : i32
    %c0_i32_0 = arith.constant 0 : i32
    return %arg0, %c0_i32 : i32, i32
  }
}

module attributes {stable_mosaic.version = 11 : i64} {
  func.func @ngcf_side_kernel(%arg0: i32, %arg1: i32, %arg2: memref<128x128xbf16, #tpu.memory_space<vmem>>, %arg3: memref<128x128xbf16, #tpu.memory_space<vmem>>, %arg4: memref<128x128xbf16, #tpu.memory_space<vmem>>, %arg5: memref<128x128xbf16, #tpu.memory_space<vmem>>, %arg6: memref<128x128xbf16, #tpu.memory_space<vmem>>, %arg7: memref<1x128xf32, #tpu.memory_space<vmem>>, %arg8: memref<128x128xf32, #tpu.memory_space<vmem>>, %arg9: memref<128x128xf32, #tpu.memory_space<vmem>>) attributes {dimension_semantics = [#tpu.dimension_semantics<parallel>, #tpu.dimension_semantics<arbitrary>], iteration_bounds = array<i64: 1, 1>, scalar_prefetch = 0 : i64, scratch_operands = 1 : i64, tpu.core_type = #tpu.core_type<tc>, window_params = [{transform_indices = @transform_0, window_bounds = array<i64: 128, 128>}, {transform_indices = @transform_1, window_bounds = array<i64: 128, 128>}, {transform_indices = @transform_2, window_bounds = array<i64: 128, 128>}, {pipeline_mode = #tpu.pipeline_mode<synchronous>, transform_indices = @transform_3, window_bounds = array<i64: 128, 128>}, {pipeline_mode = #tpu.pipeline_mode<synchronous>, transform_indices = @transform_4, window_bounds = array<i64: 128, 128>}, {pipeline_mode = #tpu.pipeline_mode<synchronous>, transform_indices = @transform_5, window_bounds = array<i64: 1, 128>}, {transform_indices = @transform_6, window_bounds = array<i64: 128, 128>}]} {
    %c0_i32 = arith.constant 0 : i32
    %0 = arith.cmpi eq, %arg1, %c0_i32 : i32
    %1 = arith.extui %0 : i1 to i32
    %c0_i32_0 = arith.constant 0 : i32
    %2 = arith.cmpi ne, %1, %c0_i32_0 : i32
    scf.if %2 {
      %cst_10 = arith.constant 0.000000e+00 : f32
      %12 = vector.broadcast %cst_10 : f32 to vector<128x128xf32>
      %c0_11 = arith.constant 0 : index
      %c0_12 = arith.constant 0 : index
      %13 = vector.load %arg9[%c0_11, %c0_12] : memref<128x128xf32, #tpu.memory_space<vmem>>, vector<128x128xf32>
      tpu.vector_store %arg9[%c0_11, %c0_12], %12 {strides = array<i32>} : memref<128x128xf32, #tpu.memory_space<vmem>>, vector<128x128xf32>,
    } else {
    }
    %c0 = arith.constant 0 : index
    %c0_1 = arith.constant 0 : index
    %3 = vector.load %arg9[%c0, %c0_1] : memref<128x128xf32, #tpu.memory_space<vmem>>, vector<128x128xf32>
    %c0_2 = arith.constant 0 : index
    %c0_3 = arith.constant 0 : index
    %4 = vector.load %arg3[%c0_2, %c0_3] : memref<128x128xbf16, #tpu.memory_space<vmem>>, vector<128x128xbf16>
    %c0_4 = arith.constant 0 : index
    %c0_5 = arith.constant 0 : index
    %5 = vector.load %arg4[%c0_4, %c0_5] : memref<128x128xbf16, #tpu.memory_space<vmem>>, vector<128x128xbf16>
    %cst = arith.constant dense<0.000000e+00> : vector<128x128xf32>
    %6 = tpu.matmul %4, %5, %cst {dimension_numbers = #tpu.dot_dimension_numbers<[1], [0], [0], [1], [0, 0, 1, 1], [], []>} : vector<128x128xbf16>, vector<128x128xbf16>, vector<128x128xf32> -> vector<128x128xf32>
    %7 = arith.addf %3, %6 : vector<128x128xf32>
    %c0_6 = arith.constant 0 : index
    %c0_7 = arith.constant 0 : index
    %8 = vector.load %arg9[%c0_6, %c0_7] : memref<128x128xf32, #tpu.memory_space<vmem>>, vector<128x128xf32>
    tpu.vector_store %arg9[%c0_6, %c0_7], %7 {strides = array<i32>} : memref<128x128xf32, #tpu.memory_space<vmem>>, vector<128x128xf32>,
    %c0_i32_8 = arith.constant 0 : i32
    %9 = arith.cmpi eq, %arg1, %c0_i32_8 : i32
    %10 = arith.extui %9 : i1 to i32
    %c0_i32_9 = arith.constant 0 : i32
    %11 = arith.cmpi ne, %10, %c0_i32_9 : i32
    scf.if %11 {
      %c0_10 = arith.constant 0 : index
      %c0_11 = arith.constant 0 : index
      %12 = vector.load %arg2[%c0_10, %c0_11] : memref<128x128xbf16, #tpu.memory_space<vmem>>, vector<128x128xbf16>
      %13 = arith.extf %12 : vector<128x128xbf16> to vector<128x128xf32>
      %c0_12 = arith.constant 0 : index
      %c0_13 = arith.constant 0 : index
      %14 = vector.load %arg9[%c0_12, %c0_13] : memref<128x128xf32, #tpu.memory_space<vmem>>, vector<128x128xf32>
      %15 = arith.addf %13, %14 : vector<128x128xf32>
      %16 = arith.truncf %15 : vector<128x128xf32> to vector<128x128xbf16>
      %17 = arith.mulf %13, %14 : vector<128x128xf32>
      %18 = arith.truncf %17 : vector<128x128xf32> to vector<128x128xbf16>
      %c0_14 = arith.constant 0 : index
      %c0_15 = arith.constant 0 : index
      %19 = vector.load %arg5[%c0_14, %c0_15] : memref<128x128xbf16, #tpu.memory_space<vmem>>, vector<128x128xbf16>
      %cst_16 = arith.constant dense<0.000000e+00> : vector<128x128xf32>
      %20 = tpu.matmul %16, %19, %cst_16 {dimension_numbers = #tpu.dot_dimension_numbers<[1], [0], [0], [1], [0, 0, 1, 1], [], []>} : vector<128x128xbf16>, vector<128x128xbf16>, vector<128x128xf32> -> vector<128x128xf32>
      %c0_17 = arith.constant 0 : index
      %c0_18 = arith.constant 0 : index
      %21 = vector.load %arg6[%c0_17, %c0_18] : memref<128x128xbf16, #tpu.memory_space<vmem>>, vector<128x128xbf16>
      %cst_19 = arith.constant dense<0.000000e+00> : vector<128x128xf32>
      %22 = tpu.matmul %18, %21, %cst_19 {dimension_numbers = #tpu.dot_dimension_numbers<[1], [0], [0], [1], [0, 0, 1, 1], [], []>} : vector<128x128xbf16>, vector<128x128xbf16>, vector<128x128xf32> -> vector<128x128xf32>
      %23 = arith.addf %20, %22 : vector<128x128xf32>
      %c0_20 = arith.constant 0 : index
      %c0_21 = arith.constant 0 : index
      %24 = vector.load %arg7[%c0_20, %c0_21] : memref<1x128xf32, #tpu.memory_space<vmem>>, vector<1x128xf32>
      %25 = vector.broadcast %24 : vector<1x128xf32> to vector<128x128xf32>
      %26 = arith.addf %23, %25 : vector<128x128xf32>
      %cst_22 = arith.constant 2.000000e-01 : f32
      %27 = vector.broadcast %cst_22 : f32 to vector<128x128xf32>
      %28 = arith.mulf %27, %26 : vector<128x128xf32>
      %29 = arith.maximumf %26, %28 : vector<128x128xf32>
      %30 = arith.mulf %29, %29 : vector<128x128xf32>
      %cst_23 = arith.constant dense<0.000000e+00> : vector<128xf32>
      %31 = vector.multi_reduction <add>, %30, %cst_23 [1] : vector<128x128xf32> to vector<128xf32>
      %32 = vector.shape_cast %31 : vector<128xf32> to vector<128x1xf32>
      %cst_24 = arith.constant 1.000000e-24 : f32
      %33 = vector.broadcast %cst_24 : f32 to vector<128x1xf32>
      %34 = arith.maximumf %32, %33 : vector<128x1xf32>
      %35 = math.rsqrt %34 : vector<128x1xf32>
      %36 = vector.broadcast %35 : vector<128x1xf32> to vector<128x128xf32>
      %37 = arith.mulf %29, %36 : vector<128x128xf32>
      %c0_25 = arith.constant 0 : index
      %c0_26 = arith.constant 0 : index
      %38 = vector.load %arg8[%c0_25, %c0_26] : memref<128x128xf32, #tpu.memory_space<vmem>>, vector<128x128xf32>
      tpu.vector_store %arg8[%c0_25, %c0_26], %37 {strides = array<i32>} : memref<128x128xf32, #tpu.memory_space<vmem>>, vector<128x128xf32>,
    } else {
    }
    return
  }
  func.func @transform_0(%arg0: i32, %arg1: i32) -> (i32, i32) {
    %c0_i32 = arith.constant 0 : i32
    %c0_i32_0 = arith.constant 0 : i32
    return %arg0, %c0_i32 : i32, i32
  }
  func.func @transform_1(%arg0: i32, %arg1: i32) -> (i32, i32) {
    %c0_i32 = arith.constant 0 : i32
    return %arg0, %arg1 : i32, i32
  }
  func.func @transform_2(%arg0: i32, %arg1: i32) -> (i32, i32) {
    %c0_i32 = arith.constant 0 : i32
    %c0_i32_0 = arith.constant 0 : i32
    return %arg1, %c0_i32 : i32, i32
  }
  func.func @transform_3(%arg0: i32, %arg1: i32) -> (i32, i32) {
    %c0_i32 = arith.constant 0 : i32
    %c0_i32_0 = arith.constant 0 : i32
    %c0_i32_1 = arith.constant 0 : i32
    return %c0_i32, %c0_i32_0 : i32, i32
  }
  func.func @transform_4(%arg0: i32, %arg1: i32) -> (i32, i32) {
    %c0_i32 = arith.constant 0 : i32
    %c0_i32_0 = arith.constant 0 : i32
    %c0_i32_1 = arith.constant 0 : i32
    return %c0_i32, %c0_i32_0 : i32, i32
  }
  func.func @transform_5(%arg0: i32, %arg1: i32) -> (i32, i32) {
    %c0_i32 = arith.constant 0 : i32
    %c0_i32_0 = arith.constant 0 : i32
    %c0_i32_1 = arith.constant 0 : i32
    return %c0_i32, %c0_i32_0 : i32, i32
  }
  func.func @transform_6(%arg0: i32, %arg1: i32) -> (i32, i32) {
    %c0_i32 = arith.constant 0 : i32
    %c0_i32_0 = arith.constant 0 : i32
    return %arg0, %c0_i32 : i32, i32
  }
}

</mosaic_0001>

<llo_original>
// kernel: ngcf_layer_forward.3
$region0: #{ngcf_layer_forward.3}
  #allocation0 [shape = 'u32[]', space=smem, size = 0x4, offset = 0x4, fixed_abs, tag = 'smem constant byte address 0x4 - core index']
  #allocation1 [shape = 'u32[72,128]{1,0:T(1,128)}', space=vmem, size = 0x9000, scoped, tag = 'internal scratch']
  #allocation2 [shape = 'f32[128,128]{1,0:T(8,128)}', space=vmem, size = 0x10000, scoped, tag = 'scratch operand']
  %s0 = inlined_call_operand.vmem [shape: bf16[128,128], index: 0, kind: input, shape index: {}]
  %s1 = inlined_call_operand.vmem [shape: bf16[128,128], index: 1, kind: input, shape index: {}]
  %s2 = inlined_call_operand.vmem [shape: bf16[128,128], index: 2, kind: input, shape index: {}]
  %s3 = inlined_call_operand.vmem [shape: bf16[128,128], index: 3, kind: input, shape index: {}]
  %s4 = inlined_call_operand.vmem [shape: bf16[128,128], index: 4, kind: input, shape index: {}]
  %s5 = inlined_call_operand.vmem [shape: f32[1,128], index: 5, kind: input, shape index: {}]
  %s6 = inlined_call_operand.vmem [shape: f32[128,128], index: 6, kind: output, shape index: {}]
  %s7 = sld [smem:[#allocation0]]
  $region42: #{ngcf_layer_forward.3} parent=0
    _
  %s9 = ssub.s32 1, %s7
  %s10 = scalar_select 0, %s9, %s7
  // Predicated region
  $region2: #{ngcf_layer_forward.3} parent=0 // pred_check
    _
  $region3: #{ngcf_layer_forward.3} parent=0 // pred_check_branch
    %12 = sbr.rel (0) target = $region5
  $region4: #{ngcf_layer_forward.3} parent=0 // pred_region
    _
  $region5: #{ngcf_layer_forward.3} parent=0 // pred_fallthru
    _
  // Predicated region
  $region6: #{ngcf_layer_forward.3} parent=0 // pred_check
    _
  $region7: #{ngcf_layer_forward.3} parent=0 // pred_check_branch
    %14 = sbr.rel (0) target = $region9
  $region8: #{ngcf_layer_forward.3} parent=0 // pred_region
    _
  $region9: #{ngcf_layer_forward.3} parent=0 // pred_fallthru
    _
  // Predicated region
  $region10: #{ngcf_layer_forward.3} parent=0 // pred_check
    _
  $region11: #{ngcf_layer_forward.3} parent=0 // pred_check_branch
    %16 = sbr.rel (0) target = $region13
  $region12: #{ngcf_layer_forward.3} parent=0 // pred_region
    _
  $region13: #{ngcf_layer_forward.3} parent=0 // pred_fallthru
    _
  // Predicated region
  $region14: #{ngcf_layer_forward.3} parent=0 // pred_check
    _
  $region15: #{ngcf_layer_forward.3} parent=0 // pred_check_branch
    %18 = sbr.rel (0) target = $region17
  $region16: #{ngcf_layer_forward.3} parent=0 // pred_region
    _
  $region17: #{ngcf_layer_forward.3} parent=0 // pred_fallthru
    _
  // Predicated region
  $region18: #{ngcf_layer_forward.3} parent=0 // pred_check
    _
  $region19: #{ngcf_layer_forward.3} parent=0 // pred_check_branch
    %20 = sbr.rel (0) target = $region21
  $region20: #{ngcf_layer_forward.3} parent=0 // pred_region
    _
  $region21: #{ngcf_layer_forward.3} parent=0 // pred_fallthru
    _
  // Predicated region
  $region22: #{ngcf_layer_forward.3} parent=0 // pred_check
    _
  $region23: #{ngcf_layer_forward.3} parent=0 // pred_check_branch
    %22 = sbr.rel (0) target = $region25
  $region24: #{ngcf_layer_forward.3} parent=0 // pred_region
    _
  $region25: #{ngcf_layer_forward.3} parent=0 // pred_fallthru
    _
  %p23 = scmp.eq.s32.totalorder 0, 0
  // Predicated region
  $region26: #{ngcf_layer_forward.3} parent=0 // pred_check
    %p24 = pneg %p23
  $region27: #{ngcf_layer_forward.3} parent=0 // pred_check_branch
    %26 = sbr.rel (%p24) target = $region29
  $region28: #{ngcf_layer_forward.3} parent=0 // pred_region
    %27 = vst [vmem:[#allocation2] sm:$0xff] 0.0
    %28 = vst [vmem:[#allocation2 + $0x8] sm:$0xff] 0.0
    %29 = vst [vmem:[#allocation2 + $0x10] sm:$0xff] 0.0
    %30 = vst [vmem:[#allocation2 + $0x18] sm:$0xff] 0.0
    %31 = vst [vmem:[#allocation2 + $0x20] sm:$0xff] 0.0
    %32 = vst [vmem:[#allocation2 + $0x28] sm:$0xff] 0.0
    %33 = vst [vmem:[#allocation2 + $0x30] sm:$0xff] 0.0
    %34 = vst [vmem:[#allocation2 + $0x38] sm:$0xff] 0.0
    %35 = vst [vmem:[#allocation2 + $0x40] sm:$0xff] 0.0
    %36 = vst [vmem:[#allocation2 + $0x48] sm:$0xff] 0.0
    %37 = vst [vmem:[#allocation2 + $0x50] sm:$0xff] 0.0
    %38 = vst [vmem:[#allocation2 + $0x58] sm:$0xff] 0.0
    %39 = vst [vmem:[#allocation2 + $0x60] sm:$0xff] 0.0
    %40 = vst [vmem:[#allocation2 + $0x68] sm:$0xff] 0.0
    %41 = vst [vmem:[#allocation2 + $0x70] sm:$0xff] 0.0
    %42 = vst [vmem:[#allocation2 + $0x78] sm:$0xff] 0.0
  $region29: #{ngcf_layer_forward.3} parent=0 // pred_fallthru
    _
  %v43 = vld [vmem:[#allocation2] sm:$0xff]
  %v44 = vld [vmem:[#allocation2 + $0x8] sm:$0xff]
  %v45 = vld [vmem:[#allocation2 + $0x10] sm:$0xff]
  %v46 = vld [vmem:[#allocation2 + $0x18] sm:$0xff]
  %v47 = vld [vmem:[#allocation2 + $0x20] sm:$0xff]
  %v48 = vld [vmem:[#allocation2 + $0x28] sm:$0xff]
  %v49 = vld [vmem:[#allocation2 + $0x30] sm:$0xff]
  %v50 = vld [vmem:[#allocation2 + $0x38] sm:$0xff]
  %v51 = vld [vmem:[#allocation2 + $0x40] sm:$0xff]
  %v52 = vld [vmem:[#allocation2 + $0x48] sm:$0xff]
  %v53 = vld [vmem:[#allocation2 + $0x50] sm:$0xff]
  %v54 = vld [vmem:[#allocation2 + $0x58] sm:$0xff]
  %v55 = vld [vmem:[#allocation2 + $0x60] sm:$0xff]
  %v56 = vld [vmem:[#allocation2 + $0x68] sm:$0xff]
  %v57 = vld [vmem:[#allocation2 + $0x70] sm:$0xff]
  %v58 = vld [vmem:[#allocation2 + $0x78] sm:$0xff]
  %v59 = vld [vmem:[%s1] sm:$0xf]
  %v60 = vld [vmem:[%s1 + $0x4] sm:$0xf]
  %v61 = vld [vmem:[%s1 + $0x8] sm:$0xf]
  %v62 = vld [vmem:[%s1 + $0xc] sm:$0xf]
  %v63 = vld [vmem:[%s1 + $0x10] sm:$0xf]
  %v64 = vld [vmem:[%s1 + $0x14] sm:$0xf]
  %v65 = vld [vmem:[%s1 + $0x18] sm:$0xf]
  %v66 = vld [vmem:[%s1 + $0x1c] sm:$0xf]
  %v67 = vld [vmem:[%s1 + $0x20] sm:$0xf]
  %v68 = vld [vmem:[%s1 + $0x24] sm:$0xf]
  %v69 = vld [vmem:[%s1 + $0x28] sm:$0xf]
  %v70 = vld [vmem:[%s1 + $0x2c] sm:$0xf]
  %v71 = vld [vmem:[%s1 + $0x30] sm:$0xf]
  %v72 = vld [vmem:[%s1 + $0x34] sm:$0xf]
  %v73 = vld [vmem:[%s1 + $0x38] sm:$0xf]
  %v74 = vld [vmem:[%s1 + $0x3c] sm:$0xf]
  %v75 = vld [vmem:[%s2] sm:$0xf]
  %v76 = vld [vmem:[%s2 + $0x4] sm:$0xf]
  %v77 = vld [vmem:[%s2 + $0x8] sm:$0xf]
  %v78 = vld [vmem:[%s2 + $0xc] sm:$0xf]
  %v79 = vld [vmem:[%s2 + $0x10] sm:$0xf]
  %v80 = vld [vmem:[%s2 + $0x14] sm:$0xf]
  %v81 = vld [vmem:[%s2 + $0x18] sm:$0xf]
  %v82 = vld [vmem:[%s2 + $0x1c] sm:$0xf]
  %v83 = vld [vmem:[%s2 + $0x20] sm:$0xf]
  %v84 = vld [vmem:[%s2 + $0x24] sm:$0xf]
  %v85 = vld [vmem:[%s2 + $0x28] sm:$0xf]
  %v86 = vld [vmem:[%s2 + $0x2c] sm:$0xf]
  %v87 = vld [vmem:[%s2 + $0x30] sm:$0xf]
  %v88 = vld [vmem:[%s2 + $0x34] sm:$0xf]
  %v89 = vld [vmem:[%s2 + $0x38] sm:$0xf]
  %v90 = vld [vmem:[%s2 + $0x3c] sm:$0xf]
  %v107 = vunpack.c.l.b16 %v59
  %v108 = vunpack.c.l.b16 %v60
  %v109 = vunpack.c.l.b16 %v61
  %v110 = vunpack.c.l.b16 %v62
  %v111 = vunpack.c.l.b16 %v63
  %v112 = vunpack.c.l.b16 %v64
  %v113 = vunpack.c.l.b16 %v65
  %v114 = vunpack.c.l.b16 %v66
  %v115 = vunpack.c.l.b16 %v67
  %v116 = vunpack.c.l.b16 %v68
  %v117 = vunpack.c.l.b16 %v69
  %v118 = vunpack.c.l.b16 %v70
  %v119 = vunpack.c.l.b16 %v71
  %v120 = vunpack.c.l.b16 %v72
  %v121 = vunpack.c.l.b16 %v73
  %v122 = vunpack.c.l.b16 %v74
  %v123 = vpack.c.b16 %v108, %v107
  %v124 = vpack.c.b16 %v110, %v109
  %v125 = vpack.c.b16 %v112, %v111
  %v126 = vpack.c.b16 %v114, %v113
  %v127 = vpack.c.b16 %v116, %v115
  %v128 = vpack.c.b16 %v118, %v117
  %v129 = vpack.c.b16 %v120, %v119
  %v130 = vpack.c.b16 %v122, %v121
  %139 = vxpose.xlu0.c.b16.start [1/8] %v123, 128
  %140 = vxpose.xlu0.c.b16.cont [2/8] %v124, 128
  %141 = vxpose.xlu0.c.b16.cont [3/8] %v125, 128
  %142 = vxpose.xlu0.c.b16.cont [4/8] %v126, 128
  %143 = vxpose.xlu0.c.b16.cont [5/8] %v127, 128
  %144 = vxpose.xlu0.c.b16.cont [6/8] %v128, 128
  %145 = vxpose.xlu0.c.b16.cont [7/8] %v129, 128
  %146 = vxpose.xlu0.c.b16.end [8/8] %v130, 128
  %v147 = vpop.trf.xlu0
  %v148 = vpop.trf.xlu0
  %v149 = vpop.trf.xlu0
  %v150 = vpop.trf.xlu0
  %v151 = vpop.trf.xlu0
  %v152 = vpop.trf.xlu0
  %v153 = vpop.trf.xlu0
  %v154 = vpop.trf.xlu0
  %v171 = vunpack.c.l.b16 %v75
  %v172 = vunpack.c.l.b16 %v76
  %v173 = vunpack.c.l.b16 %v77
  %v174 = vunpack.c.l.b16 %v78
  %v175 = vunpack.c.l.b16 %v79
  %v176 = vunpack.c.l.b16 %v80
  %v177 = vunpack.c.l.b16 %v81
  %v178 = vunpack.c.l.b16 %v82
  %v179 = vunpack.c.l.b16 %v83
  %v180 = vunpack.c.l.b16 %v84
  %v181 = vunpack.c.l.b16 %v85
  %v182 = vunpack.c.l.b16 %v86
  %v183 = vunpack.c.l.b16 %v87
  %v184 = vunpack.c.l.b16 %v88
  %v185 = vunpack.c.l.b16 %v89
  %v186 = vunpack.c.l.b16 %v90
  %v187 = vpack.c.b16 %v172, %v171
  %v188 = vpack.c.b16 %v174, %v173
  %v189 = vpack.c.b16 %v176, %v175
  %v190 = vpack.c.b16 %v178, %v177
  %v191 = vpack.c.b16 %v180, %v179
  %v192 = vpack.c.b16 %v182, %v181
  %v193 = vpack.c.b16 %v184, %v183
  %v194 = vpack.c.b16 %v186, %v185
  %203 = vmatpush.bf16.msra.mxu0 %v194
  %204 = vmatpush.bf16.msra.mxu0 %v193
  %205 = vmatpush.bf16.msra.mxu0 %v192
  %206 = vmatpush.bf16.msra.mxu0 %v191
  %207 = vmatpush.bf16.msra.mxu0 %v190
  %208 = vmatpush.bf16.msra.mxu0 %v189
  %209 = vmatpush.bf16.msra.mxu0 %v188
  %210 = vmatpush.bf16.msra.mxu0 %v187
  %211 = vmatmul.bf16.gmra.mxu0 %v147
  %v212 = vpop.f32.mrf.mxu0
  %v213 = vadd.f32 0.0, %v212
  %v214 = vpop.f32.mrf.mxu0
  %v215 = vadd.f32 0.0, %v214
  %216 = vmatmul.bf16.gmra.mxu0 %v148
  %v217 = vpop.f32.mrf.mxu0
  %v218 = vadd.f32 0.0, %v217
  %v219 = vpop.f32.mrf.mxu0
  %v220 = vadd.f32 0.0, %v219
  %221 = vmatmul.bf16.gmra.mxu0 %v149
  %v222 = vpop.f32.mrf.mxu0
  %v223 = vadd.f32 0.0, %v222
  %v224 = vpop.f32.mrf.mxu0
  %v225 = vadd.f32 0.0, %v224
  %226 = vmatmul.bf16.gmra.mxu0 %v150
  %v227 = vpop.f32.mrf.mxu0
  %v228 = vadd.f32 0.0, %v227
  %v229 = vpop.f32.mrf.mxu0
  %v230 = vadd.f32 0.0, %v229
  %231 = vmatmul.bf16.gmra.mxu0 %v151
  %v232 = vpop.f32.mrf.mxu0
  %v233 = vadd.f32 0.0, %v232
  %v234 = vpop.f32.mrf.mxu0
  %v235 = vadd.f32 0.0, %v234
  %236 = vmatmul.bf16.gmra.mxu0 %v152
  %v237 = vpop.f32.mrf.mxu0
  %v238 = vadd.f32 0.0, %v237
  %v239 = vpop.f32.mrf.mxu0
  %v240 = vadd.f32 0.0, %v239
  %241 = vmatmul.bf16.gmra.mxu0 %v153
  %v242 = vpop.f32.mrf.mxu0
  %v243 = vadd.f32 0.0, %v242
  %v244 = vpop.f32.mrf.mxu0
  %v245 = vadd.f32 0.0, %v244
  %246 = vmatmul.bf16.gmra.mxu0 %v154
  %v247 = vpop.f32.mrf.mxu0
  %v248 = vadd.f32 0.0, %v247
  %v249 = vpop.f32.mrf.mxu0
  %v250 = vadd.f32 0.0, %v249
  %251 = vdwg.mxu0
  %v252 = vadd.f32 %v43, %v213
  %v253 = vadd.f32 %v44, %v215
  %v254 = vadd.f32 %v45, %v218
  %v255 = vadd.f32 %v46, %v220
  %v256 = vadd.f32 %v47, %v223
  %v257 = vadd.f32 %v48, %v225
  %v258 = vadd.f32 %v49, %v228
  %v259 = vadd.f32 %v50, %v230
  %v260 = vadd.f32 %v51, %v233
  %v261 = vadd.f32 %v52, %v235
  %v262 = vadd.f32 %v53, %v238
  %v263 = vadd.f32 %v54, %v240
  %v264 = vadd.f32 %v55, %v243
  %v265 = vadd.f32 %v56, %v245
  %v266 = vadd.f32 %v57, %v248
  %v267 = vadd.f32 %v58, %v250
  %268 = vst [vmem:[#allocation2] sm:$0xff] %v252
  %269 = vst [vmem:[#allocation2 + $0x8] sm:$0xff] %v253
  %270 = vst [vmem:[#allocation2 + $0x10] sm:$0xff] %v254
  %271 = vst [vmem:[#allocation2 + $0x18] sm:$0xff] %v255
  %272 = vst [vmem:[#allocation2 + $0x20] sm:$0xff] %v256
  %273 = vst [vmem:[#allocation2 + $0x28] sm:$0xff] %v257
  %274 = vst [vmem:[#allocation2 + $0x30] sm:$0xff] %v258
  %275 = vst [vmem:[#allocation2 + $0x38] sm:$0xff] %v259
  %276 = vst [vmem:[#allocation2 + $0x40] sm:$0xff] %v260
  %277 = vst [vmem:[#allocation2 + $0x48] sm:$0xff] %v261
  %278 = vst [vmem:[#allocation2 + $0x50] sm:$0xff] %v262
  %279 = vst [vmem:[#allocation2 + $0x58] sm:$0xff] %v263
  %280 = vst [vmem:[#allocation2 + $0x60] sm:$0xff] %v264
  %281 = vst [vmem:[#allocation2 + $0x68] sm:$0xff] %v265
  %282 = vst [vmem:[#allocation2 + $0x70] sm:$0xff] %v266
  %283 = vst [vmem:[#allocation2 + $0x78] sm:$0xff] %v267
  // Predicated region
  $region30: #{ngcf_layer_forward.3} parent=0 // pred_check
    %p284 = pneg %p23
  $region31: #{ngcf_layer_forward.3} parent=0 // pred_check_branch
    %286 = sbr.rel (%p284) target = $region33
  $region32: #{ngcf_layer_forward.3} parent=0 // pred_region
    %v287 = vld [vmem:[%s0] sm:$0xf]
    %v288 = vld [vmem:[%s0 + $0x4] sm:$0xf]
    %v289 = vld [vmem:[%s0 + $0x8] sm:$0xf]
    %v290 = vld [vmem:[%s0 + $0xc] sm:$0xf]
    %v291 = vld [vmem:[%s0 + $0x10] sm:$0xf]
    %v292 = vld [vmem:[%s0 + $0x14] sm:$0xf]
    %v293 = vld [vmem:[%s0 + $0x18] sm:$0xf]
    %v294 = vld [vmem:[%s0 + $0x1c] sm:$0xf]
    %v295 = vld [vmem:[%s0 + $0x20] sm:$0xf]
    %v296 = vld [vmem:[%s0 + $0x24] sm:$0xf]
    %v297 = vld [vmem:[%s0 + $0x28] sm:$0xf]
    %v298 = vld [vmem:[%s0 + $0x2c] sm:$0xf]
    %v299 = vld [vmem:[%s0 + $0x30] sm:$0xf]
    %v300 = vld [vmem:[%s0 + $0x34] sm:$0xf]
    %v301 = vld [vmem:[%s0 + $0x38] sm:$0xf]
    %v302 = vld [vmem:[%s0 + $0x3c] sm:$0xf]
    %v303 = vunpack.c.l.bf16 %v287
    %v304 = vunpack.c.l.bf16 %v288
    %v305 = vunpack.c.l.bf16 %v289
    %v306 = vunpack.c.l.bf16 %v290
    %v307 = vunpack.c.l.bf16 %v291
    %v308 = vunpack.c.l.bf16 %v292
    %v309 = vunpack.c.l.bf16 %v293
    %v310 = vunpack.c.l.bf16 %v294
    %v311 = vunpack.c.l.bf16 %v295
    %v312 = vunpack.c.l.bf16 %v296
    %v313 = vunpack.c.l.bf16 %v297
    %v314 = vunpack.c.l.bf16 %v298
    %v315 = vunpack.c.l.bf16 %v299
    %v316 = vunpack.c.l.bf16 %v300
    %v317 = vunpack.c.l.bf16 %v301
    %v318 = vunpack.c.l.bf16 %v302
    %v319 = vld [vmem:[#allocation2] sm:$0xff]
    %v320 = vld [vmem:[#allocation2 + $0x8] sm:$0xff]
    %v321 = vld [vmem:[#allocation2 + $0x10] sm:$0xff]
    %v322 = vld [vmem:[#allocation2 + $0x18] sm:$0xff]
    %v323 = vld [vmem:[#allocation2 + $0x20] sm:$0xff]
    %v324 = vld [vmem:[#allocation2 + $0x28] sm:$0xff]
    %v325 = vld [vmem:[#allocation2 + $0x30] sm:$0xff]
    %v326 = vld [vmem:[#allocation2 + $0x38] sm:$0xff]
    %v327 = vld [vmem:[#allocation2 + $0x40] sm:$0xff]
    %v328 = vld [vmem:[#allocation2 + $0x48] sm:$0xff]
    %v329 = vld [vmem:[#allocation2 + $0x50] sm:$0xff]
    %v330 = vld [vmem:[#allocation2 + $0x58] sm:$0xff]
    %v331 = vld [vmem:[#allocation2 + $0x60] sm:$0xff]
    %v332 = vld [vmem:[#allocation2 + $0x68] sm:$0xff]
    %v333 = vld [vmem:[#allocation2 + $0x70] sm:$0xff]
    %v334 = vld [vmem:[#allocation2 + $0x78] sm:$0xff]
    %v335 = vadd.f32 %v303, %v319
    %v336 = vadd.f32 %v304, %v320
    %v337 = vadd.f32 %v305, %v321
    %v338 = vadd.f32 %v306, %v322
    %v339 = vadd.f32 %v307, %v323
    %v340 = vadd.f32 %v308, %v324
    %v341 = vadd.f32 %v309, %v325
    %v342 = vadd.f32 %v310, %v326
    %v343 = vadd.f32 %v311, %v327
    %v344 = vadd.f32 %v312, %v328
    %v345 = vadd.f32 %v313, %v329
    %v346 = vadd.f32 %v314, %v330
    %v347 = vadd.f32 %v315, %v331
    %v348 = vadd.f32 %v316, %v332
    %v349 = vadd.f32 %v317, %v333
    %v350 = vadd.f32 %v318, %v334
    %v351 = vpack.c.bf16 %v336, %v335
    %v352 = vpack.c.bf16 %v338, %v337
    %v353 = vpack.c.bf16 %v340, %v339
    %v354 = vpack.c.bf16 %v342, %v341
    %v355 = vpack.c.bf16 %v344, %v343
    %v356 = vpack.c.bf16 %v346, %v345
    %v357 = vpack.c.bf16 %v348, %v347
    %v358 = vpack.c.bf16 %v350, %v349
    %v359 = vmul.f32 %v303, %v319
    %v360 = vmul.f32 %v304, %v320
    %v361 = vmul.f32 %v305, %v321
    %v362 = vmul.f32 %v306, %v322
    %v363 = vmul.f32 %v307, %v323
    %v364 = vmul.f32 %v308, %v324
    %v365 = vmul.f32 %v309, %v325
    %v366 = vmul.f32 %v310, %v326
    %v367 = vmul.f32 %v311, %v327
    %v368 = vmul.f32 %v312, %v328
    %v369 = vmul.f32 %v313, %v329
    %v370 = vmul.f32 %v314, %v330
    %v371 = vmul.f32 %v315, %v331
    %v372 = vmul.f32 %v316, %v332
    %v373 = vmul.f32 %v317, %v333
    %v374 = vmul.f32 %v318, %v334
    %v375 = vpack.c.bf16 %v360, %v359
    %v376 = vpack.c.bf16 %v362, %v361
    %v377 = vpack.c.bf16 %v364, %v363
    %v378 = vpack.c.bf16 %v366, %v365
    %v379 = vpack.c.bf16 %v368, %v367
    %v380 = vpack.c.bf16 %v370, %v369
    %v381 = vpack.c.bf16 %v372, %v371
    %v382 = vpack.c.bf16 %v374, %v373
    %v383 = vld [vmem:[%s3] sm:$0xf]
    %v384 = vld [vmem:[%s3 + $0x4] sm:$0xf]
    %v385 = vld [vmem:[%s3 + $0x8] sm:$0xf]
    %v386 = vld [vmem:[%s3 + $0xc] sm:$0xf]
    %v387 = vld [vmem:[%s3 + $0x10] sm:$0xf]
    %v388 = vld [vmem:[%s3 + $0x14] sm:$0xf]
    %v389 = vld [vmem:[%s3 + $0x18] sm:$0xf]
    %v390 = vld [vmem:[%s3 + $0x1c] sm:$0xf]
    %v391 = vld [vmem:[%s3 + $0x20] sm:$0xf]
    %v392 = vld [vmem:[%s3 + $0x24] sm:$0xf]
    %v393 = vld [vmem:[%s3 + $0x28] sm:$0xf]
    %v394 = vld [vmem:[%s3 + $0x2c] sm:$0xf]
    %v395 = vld [vmem:[%s3 + $0x30] sm:$0xf]
    %v396 = vld [vmem:[%s3 + $0x34] sm:$0xf]
    %v397 = vld [vmem:[%s3 + $0x38] sm:$0xf]
    %v398 = vld [vmem:[%s3 + $0x3c] sm:$0xf]
    %v399 = vld [vmem:[%s4] sm:$0xf]
    %v400 = vld [vmem:[%s4 + $0x4] sm:$0xf]
    %v401 = vld [vmem:[%s4 + $0x8] sm:$0xf]
    %v402 = vld [vmem:[%s4 + $0xc] sm:$0xf]
    %v403 = vld [vmem:[%s4 + $0x10] sm:$0xf]
    %v404 = vld [vmem:[%s4 + $0x14] sm:$0xf]
    %v405 = vld [vmem:[%s4 + $0x18] sm:$0xf]
    %v406 = vld [vmem:[%s4 + $0x1c] sm:$0xf]
    %v407 = vld [vmem:[%s4 + $0x20] sm:$0xf]
    %v408 = vld [vmem:[%s4 + $0x24] sm:$0xf]
    %v409 = vld [vmem:[%s4 + $0x28] sm:$0xf]
    %v410 = vld [vmem:[%s4 + $0x2c] sm:$0xf]
    %v411 = vld [vmem:[%s4 + $0x30] sm:$0xf]
    %v412 = vld [vmem:[%s4 + $0x34] sm:$0xf]
    %v413 = vld [vmem:[%s4 + $0x38] sm:$0xf]
    %v414 = vld [vmem:[%s4 + $0x3c] sm:$0xf]
    %v431 = vunpack.c.l.b16 %v399
    %v432 = vunpack.c.l.b16 %v400
    %v433 = vunpack.c.l.b16 %v401
    %v434 = vunpack.c.l.b16 %v402
    %v435 = vunpack.c.l.b16 %v403
    %v436 = vunpack.c.l.b16 %v404
    %v437 = vunpack.c.l.b16 %v405
    %v438 = vunpack.c.l.b16 %v406
    %v439 = vunpack.c.l.b16 %v407
    %v440 = vunpack.c.l.b16 %v408
    %v441 = vunpack.c.l.b16 %v409
    %v442 = vunpack.c.l.b16 %v410
    %v443 = vunpack.c.l.b16 %v411
    %v444 = vunpack.c.l.b16 %v412
    %v445 = vunpack.c.l.b16 %v413
    %v446 = vunpack.c.l.b16 %v414
    %v447 = vpack.c.b16 %v432, %v431
    %v448 = vpack.c.b16 %v434, %v433
    %v449 = vpack.c.b16 %v436, %v435
    %v450 = vpack.c.b16 %v438, %v437
    %v451 = vpack.c.b16 %v440, %v439
    %v452 = vpack.c.b16 %v442, %v441
    %v453 = vpack.c.b16 %v444, %v443
    %v454 = vpack.c.b16 %v446, %v445
    %463 = vmatpush.bf16.msra.mxu0 %v454
    %464 = vmatpush.bf16.msra.mxu0 %v453
    %465 = vmatpush.bf16.msra.mxu0 %v452
    %466 = vmatpush.bf16.msra.mxu0 %v451
    %467 = vmatpush.bf16.msra.mxu0 %v450
    %468 = vmatpush.bf16.msra.mxu0 %v449
    %469 = vmatpush.bf16.msra.mxu0 %v448
    %470 = vmatpush.bf16.msra.mxu0 %v447
    %471 = vmatmul.bf16.gmra.mxu0 %v375
    %v472 = vpop.f32.mrf.mxu0
    %v473 = vadd.f32 0.0, %v472
    %v474 = vpop.f32.mrf.mxu0
    %v475 = vadd.f32 0.0, %v474
    %476 = vmatmul.bf16.gmra.mxu0 %v376
    %v477 = vpop.f32.mrf.mxu0
    %v478 = vadd.f32 0.0, %v477
    %v479 = vpop.f32.mrf.mxu0
    %v480 = vadd.f32 0.0, %v479
    %481 = vmatmul.bf16.gmra.mxu0 %v377
    %v482 = vpop.f32.mrf.mxu0
    %v483 = vadd.f32 0.0, %v482
    %v484 = vpop.f32.mrf.mxu0
    %v485 = vadd.f32 0.0, %v484
    %486 = vmatmul.bf16.gmra.mxu0 %v378
    %v487 = vpop.f32.mrf.mxu0
    %v488 = vadd.f32 0.0, %v487
    %v489 = vpop.f32.mrf.mxu0
    %v490 = vadd.f32 0.0, %v489
    %491 = vmatmul.bf16.gmra.mxu0 %v379
    %v492 = vpop.f32.mrf.mxu0
    %v493 = vadd.f32 0.0, %v492
    %v494 = vpop.f32.mrf.mxu0
    %v495 = vadd.f32 0.0, %v494
    %496 = vmatmul.bf16.gmra.mxu0 %v380
    %v497 = vpop.f32.mrf.mxu0
    %v498 = vadd.f32 0.0, %v497
    %v499 = vpop.f32.mrf.mxu0
    %v500 = vadd.f32 0.0, %v499
    %501 = vmatmul.bf16.gmra.mxu0 %v381
    %v502 = vpop.f32.mrf.mxu0
    %v503 = vadd.f32 0.0, %v502
    %v504 = vpop.f32.mrf.mxu0
    %v505 = vadd.f32 0.0, %v504
    %506 = vmatmul.bf16.gmra.mxu0 %v382
    %v507 = vpop.f32.mrf.mxu0
    %v508 = vadd.f32 0.0, %v507
    %v509 = vpop.f32.mrf.mxu0
    %v510 = vadd.f32 0.0, %v509
    %511 = vdwg.mxu0
    %v528 = vunpack.c.l.b16 %v383
    %v529 = vunpack.c.l.b16 %v384
    %v530 = vunpack.c.l.b16 %v385
    %v531 = vunpack.c.l.b16 %v386
    %v532 = vunpack.c.l.b16 %v387
    %v533 = vunpack.c.l.b16 %v388
    %v534 = vunpack.c.l.b16 %v389
    %v535 = vunpack.c.l.b16 %v390
    %v536 = vunpack.c.l.b16 %v391
    %v537 = vunpack.c.l.b16 %v392
    %v538 = vunpack.c.l.b16 %v393
    %v539 = vunpack.c.l.b16 %v394
    %v540 = vunpack.c.l.b16 %v395
    %v541 = vunpack.c.l.b16 %v396
    %v542 = vunpack.c.l.b16 %v397
    %v543 = vunpack.c.l.b16 %v398
    %v544 = vpack.c.b16 %v529, %v528
    %v545 = vpack.c.b16 %v531, %v530
    %v546 = vpack.c.b16 %v533, %v532
    %v547 = vpack.c.b16 %v535, %v534
    %v548 = vpack.c.b16 %v537, %v536
    %v549 = vpack.c.b16 %v539, %v538
    %v550 = vpack.c.b16 %v541, %v540
    %v551 = vpack.c.b16 %v543, %v542
    %560 = vmatpush.bf16.msra.mxu0 %v551
    %561 = vmatpush.bf16.msra.mxu0 %v550
    %562 = vmatpush.bf16.msra.mxu0 %v549
    %563 = vmatpush.bf16.msra.mxu0 %v548
    %564 = vmatpush.bf16.msra.mxu0 %v547
    %565 = vmatpush.bf16.msra.mxu0 %v546
    %566 = vmatpush.bf16.msra.mxu0 %v545
    %567 = vmatpush.bf16.msra.mxu0 %v544
    %568 = vmatmul.bf16.gmra.mxu0 %v351
    %v569 = vpop.f32.mrf.mxu0
    %v570 = vadd.f32 %v473, %v569
    %v571 = vpop.f32.mrf.mxu0
    %v572 = vadd.f32 %v475, %v571
    %573 = vmatmul.bf16.gmra.mxu0 %v352
    %v574 = vpop.f32.mrf.mxu0
    %v575 = vadd.f32 %v478, %v574
    %v576 = vpop.f32.mrf.mxu0
    %v577 = vadd.f32 %v480, %v576
    %578 = vmatmul.bf16.gmra.mxu0 %v353
    %v579 = vpop.f32.mrf.mxu0
    %v580 = vadd.f32 %v483, %v579
    %v581 = vpop.f32.mrf.mxu0
    %v582 = vadd.f32 %v485, %v581
    %583 = vmatmul.bf16.gmra.mxu0 %v354
    %v584 = vpop.f32.mrf.mxu0
    %v585 = vadd.f32 %v488, %v584
    %v586 = vpop.f32.mrf.mxu0
    %v587 = vadd.f32 %v490, %v586
    %588 = vmatmul.bf16.gmra.mxu0 %v355
    %v589 = vpop.f32.mrf.mxu0
    %v590 = vadd.f32 %v493, %v589
    %v591 = vpop.f32.mrf.mxu0
    %v592 = vadd.f32 %v495, %v591
    %593 = vmatmul.bf16.gmra.mxu0 %v356
    %v594 = vpop.f32.mrf.mxu0
    %v595 = vadd.f32 %v498, %v594
    %v596 = vpop.f32.mrf.mxu0
    %v597 = vadd.f32 %v500, %v596
    %598 = vmatmul.bf16.gmra.mxu0 %v357
    %v599 = vpop.f32.mrf.mxu0
    %v600 = vadd.f32 %v503, %v599
    %v601 = vpop.f32.mrf.mxu0
    %v602 = vadd.f32 %v505, %v601
    %603 = vmatmul.bf16.gmra.mxu0 %v358
    %v604 = vpop.f32.mrf.mxu0
    %v605 = vadd.f32 %v508, %v604
    %v606 = vpop.f32.mrf.mxu0
    %v607 = vadd.f32 %v510, %v606
    %608 = vdwg.mxu0
    %v609 = vld [vmem:[%s5] sm:$0x1]
    %v611 = vperm.slane %v609, 0
    %v613 = vadd.f32 %v570, %v611
    %v614 = vadd.f32 %v572, %v611
    %v615 = vadd.f32 %v575, %v611
    %v616 = vadd.f32 %v577, %v611
    %v617 = vadd.f32 %v580, %v611
    %v618 = vadd.f32 %v582, %v611
    %v619 = vadd.f32 %v585, %v611
    %v620 = vadd.f32 %v587, %v611
    %v621 = vadd.f32 %v590, %v611
    %v622 = vadd.f32 %v592, %v611
    %v623 = vadd.f32 %v595, %v611
    %v624 = vadd.f32 %v597, %v611
    %v625 = vadd.f32 %v600, %v611
    %v626 = vadd.f32 %v602, %v611
    %v627 = vadd.f32 %v605, %v611
    %v628 = vadd.f32 %v607, %v611
    %v629 = vmul.f32 %v613, 0.2
    %v630 = vmul.f32 %v614, 0.2
    %v631 = vmul.f32 %v615, 0.2
    %v632 = vmul.f32 %v616, 0.2
    %v633 = vmul.f32 %v617, 0.2
    %v634 = vmul.f32 %v618, 0.2
    %v635 = vmul.f32 %v619, 0.2
    %v636 = vmul.f32 %v620, 0.2
    %v637 = vmul.f32 %v621, 0.2
    %v638 = vmul.f32 %v622, 0.2
    %v639 = vmul.f32 %v623, 0.2
    %v640 = vmul.f32 %v624, 0.2
    %v641 = vmul.f32 %v625, 0.2
    %v642 = vmul.f32 %v626, 0.2
    %v643 = vmul.f32 %v627, 0.2
    %v644 = vmul.f32 %v628, 0.2
    %v645 = vmax.f32 %v613, %v629
    %v646 = vmax.f32 %v614, %v630
    %v647 = vmax.f32 %v615, %v631
    %v648 = vmax.f32 %v616, %v632
    %v649 = vmax.f32 %v617, %v633
    %v650 = vmax.f32 %v618, %v634
    %v651 = vmax.f32 %v619, %v635
    %v652 = vmax.f32 %v620, %v636
    %v653 = vmax.f32 %v621, %v637
    %v654 = vmax.f32 %v622, %v638
    %v655 = vmax.f32 %v623, %v639
    %v656 = vmax.f32 %v624, %v640
    %v657 = vmax.f32 %v625, %v641
    %v658 = vmax.f32 %v626, %v642
    %v659 = vmax.f32 %v627, %v643
    %v660 = vmax.f32 %v628, %v644
    %v661 = vmul.f32 %v645, %v645
    %v662 = vmul.f32 %v646, %v646
    %v663 = vmul.f32 %v647, %v647
    %v664 = vmul.f32 %v648, %v648
    %v665 = vmul.f32 %v649, %v649
    %v666 = vmul.f32 %v650, %v650
    %v667 = vmul.f32 %v651, %v651
    %v668 = vmul.f32 %v652, %v652
    %v669 = vmul.f32 %v653, %v653
    %v670 = vmul.f32 %v654, %v654
    %v671 = vmul.f32 %v655, %v655
    %v672 = vmul.f32 %v656, %v656
    %v673 = vmul.f32 %v657, %v657
    %v674 = vmul.f32 %v658, %v658
    %v675 = vmul.f32 %v659, %v659
    %v676 = vmul.f32 %v660, %v660
    %677 = vadd.xlane.f32.xlu0 %v661
    %v678 = vpop.xlane.xlu0 %677
    %679 = vadd.xlane.f32.xlu0 %v662
    %v680 = vpop.xlane.xlu0 %679
    %681 = vadd.xlane.f32.xlu0 %v663
    %v682 = vpop.xlane.xlu0 %681
    %683 = vadd.xlane.f32.xlu0 %v664
    %v684 = vpop.xlane.xlu0 %683
    %685 = vadd.xlane.f32.xlu0 %v665
    %v686 = vpop.xlane.xlu0 %685
    %687 = vadd.xlane.f32.xlu0 %v666
    %v688 = vpop.xlane.xlu0 %687
    %689 = vadd.xlane.f32.xlu0 %v667
    %v690 = vpop.xlane.xlu0 %689
    %691 = vadd.xlane.f32.xlu0 %v668
    %v692 = vpop.xlane.xlu0 %691
    %693 = vadd.xlane.f32.xlu0 %v669
    %v694 = vpop.xlane.xlu0 %693
    %695 = vadd.xlane.f32.xlu0 %v670
    %v696 = vpop.xlane.xlu0 %695
    %697 = vadd.xlane.f32.xlu0 %v671
    %v698 = vpop.xlane.xlu0 %697
    %699 = vadd.xlane.f32.xlu0 %v672
    %v700 = vpop.xlane.xlu0 %699
    %701 = vadd.xlane.f32.xlu0 %v673
    %v702 = vpop.xlane.xlu0 %701
    %703 = vadd.xlane.f32.xlu0 %v674
    %v704 = vpop.xlane.xlu0 %703
    %705 = vadd.xlane.f32.xlu0 %v675
    %v706 = vpop.xlane.xlu0 %705
    %707 = vadd.xlane.f32.xlu0 %v676
    %v708 = vpop.xlane.xlu0 %707
    %v709 = vmax.f32 %v678, 1e-24
    %v710 = vmax.f32 %v680, 1e-24
    %v711 = vmax.f32 %v682, 1e-24
    %v712 = vmax.f32 %v684, 1e-24
    %v713 = vmax.f32 %v686, 1e-24
    %v714 = vmax.f32 %v688, 1e-24
    %v715 = vmax.f32 %v690, 1e-24
    %v716 = vmax.f32 %v692, 1e-24
    %v717 = vmax.f32 %v694, 1e-24
    %v718 = vmax.f32 %v696, 1e-24
    %v719 = vmax.f32 %v698, 1e-24
    %v720 = vmax.f32 %v700, 1e-24
    %v721 = vmax.f32 %v702, 1e-24
    %v722 = vmax.f32 %v704, 1e-24
    %v723 = vmax.f32 %v706, 1e-24
    %v724 = vmax.f32 %v708, 1e-24
    %v725 = vrsqrt.pop %v709
    %v726 = vmul.f32 %v725, %v709
    %v727 = vmul.f32 %v726, %v725
    %v728 = vmul.f32 0.5, %v727
    %v729 = vsub.f32 1.5, %v728
    %v730 = vmul.f32 %v725, %v729
    %vm731 = vweird.f32 %v709
    %vm732 = vweird.f32 %v725
    %vm733 = vmor %vm731, %vm732
    %v734 = vsel %vm733, %v725, %v730
    %v735 = vrsqrt.pop %v710
    %v736 = vmul.f32 %v735, %v710
    %v737 = vmul.f32 %v736, %v735
    %v738 = vmul.f32 0.5, %v737
    %v739 = vsub.f32 1.5, %v738
    %v740 = vmul.f32 %v735, %v739
    %vm741 = vweird.f32 %v710
    %vm742 = vweird.f32 %v735
    %vm743 = vmor %vm741, %vm742
    %v744 = vsel %vm743, %v735, %v740
    %v745 = vrsqrt.pop %v711
    %v746 = vmul.f32 %v745, %v711
    %v747 = vmul.f32 %v746, %v745
    %v748 = vmul.f32 0.5, %v747
    %v749 = vsub.f32 1.5, %v748
    %v750 = vmul.f32 %v745, %v749
    %vm751 = vweird.f32 %v711
    %vm752 = vweird.f32 %v745
    %vm753 = vmor %vm751, %vm752
    %v754 = vsel %vm753, %v745, %v750
    %v755 = vrsqrt.pop %v712
    %v756 = vmul.f32 %v755, %v712
    %v757 = vmul.f32 %v756, %v755
    %v758 = vmul.f32 0.5, %v757
    %v759 = vsub.f32 1.5, %v758
    %v760 = vmul.f32 %v755, %v759
    %vm761 = vweird.f32 %v712
    %vm762 = vweird.f32 %v755
    %vm763 = vmor %vm761, %vm762
    %v764 = vsel %vm763, %v755, %v760
    %v765 = vrsqrt.pop %v713
    %v766 = vmul.f32 %v765, %v713
    %v767 = vmul.f32 %v766, %v765
    %v768 = vmul.f32 0.5, %v767
    %v769 = vsub.f32 1.5, %v768
    %v770 = vmul.f32 %v765, %v769
    %vm771 = vweird.f32 %v713
    %vm772 = vweird.f32 %v765
    %vm773 = vmor %vm771, %vm772
    %v774 = vsel %vm773, %v765, %v770
    %v775 = vrsqrt.pop %v714
    %v776 = vmul.f32 %v775, %v714
    %v777 = vmul.f32 %v776, %v775
    %v778 = vmul.f32 0.5, %v777
    %v779 = vsub.f32 1.5, %v778
    %v780 = vmul.f32 %v775, %v779
    %vm781 = vweird.f32 %v714
    %vm782 = vweird.f32 %v775
    %vm783 = vmor %vm781, %vm782
    %v784 = vsel %vm783, %v775, %v780
    %v785 = vrsqrt.pop %v715
    %v786 = vmul.f32 %v785, %v715
    %v787 = vmul.f32 %v786, %v785
    %v788 = vmul.f32 0.5, %v787
    %v789 = vsub.f32 1.5, %v788
    %v790 = vmul.f32 %v785, %v789
    %vm791 = vweird.f32 %v715
    %vm792 = vweird.f32 %v785
    %vm793 = vmor %vm791, %vm792
    %v794 = vsel %vm793, %v785, %v790
    %v795 = vrsqrt.pop %v716
    %v796 = vmul.f32 %v795, %v716
    %v797 = vmul.f32 %v796, %v795
    %v798 = vmul.f32 0.5, %v797
    %v799 = vsub.f32 1.5, %v798
    %v800 = vmul.f32 %v795, %v799
    %vm801 = vweird.f32 %v716
    %vm802 = vweird.f32 %v795
    %vm803 = vmor %vm801, %vm802
    %v804 = vsel %vm803, %v795, %v800
    %v805 = vrsqrt.pop %v717
    %v806 = vmul.f32 %v805, %v717
    %v807 = vmul.f32 %v806, %v805
    %v808 = vmul.f32 0.5, %v807
    %v809 = vsub.f32 1.5, %v808
    %v810 = vmul.f32 %v805, %v809
    %vm811 = vweird.f32 %v717
    %vm812 = vweird.f32 %v805
    %vm813 = vmor %vm811, %vm812
    %v814 = vsel %vm813, %v805, %v810
    %v815 = vrsqrt.pop %v718
    %v816 = vmul.f32 %v815, %v718
    %v817 = vmul.f32 %v816, %v815
    %v818 = vmul.f32 0.5, %v817
    %v819 = vsub.f32 1.5, %v818
    %v820 = vmul.f32 %v815, %v819
    %vm821 = vweird.f32 %v718
    %vm822 = vweird.f32 %v815
    %vm823 = vmor %vm821, %vm822
    %v824 = vsel %vm823, %v815, %v820
    %v825 = vrsqrt.pop %v719
    %v826 = vmul.f32 %v825, %v719
    %v827 = vmul.f32 %v826, %v825
    %v828 = vmul.f32 0.5, %v827
    %v829 = vsub.f32 1.5, %v828
    %v830 = vmul.f32 %v825, %v829
    %vm831 = vweird.f32 %v719
    %vm832 = vweird.f32 %v825
    %vm833 = vmor %vm831, %vm832
    %v834 = vsel %vm833, %v825, %v830
    %v835 = vrsqrt.pop %v720
    %v836 = vmul.f32 %v835, %v720
    %v837 = vmul.f32 %v836, %v835
    %v838 = vmul.f32 0.5, %v837
    %v839 = vsub.f32 1.5, %v838
    %v840 = vmul.f32 %v835, %v839
    %vm841 = vweird.f32 %v720
    %vm842 = vweird.f32 %v835
    %vm843 = vmor %vm841, %vm842
    %v844 = vsel %vm843, %v835, %v840
    %v845 = vrsqrt.pop %v721
    %v846 = vmul.f32 %v845, %v721
    %v847 = vmul.f32 %v846, %v845
    %v848 = vmul.f32 0.5, %v847
    %v849 = vsub.f32 1.5, %v848
    %v850 = vmul.f32 %v845, %v849
    %vm851 = vweird.f32 %v721
    %vm852 = vweird.f32 %v845
    %vm853 = vmor %vm851, %vm852
    %v854 = vsel %vm853, %v845, %v850
    %v855 = vrsqrt.pop %v722
    %v856 = vmul.f32 %v855, %v722
    %v857 = vmul.f32 %v856, %v855
    %v858 = vmul.f32 0.5, %v857
    %v859 = vsub.f32 1.5, %v858
    %v860 = vmul.f32 %v855, %v859
    %vm861 = vweird.f32 %v722
    %vm862 = vweird.f32 %v855
    %vm863 = vmor %vm861, %vm862
    %v864 = vsel %vm863, %v855, %v860
    %v865 = vrsqrt.pop %v723
    %v866 = vmul.f32 %v865, %v723
    %v867 = vmul.f32 %v866, %v865
    %v868 = vmul.f32 0.5, %v867
    %v869 = vsub.f32 1.5, %v868
    %v870 = vmul.f32 %v865, %v869
    %vm871 = vweird.f32 %v723
    %vm872 = vweird.f32 %v865
    %vm873 = vmor %vm871, %vm872
    %v874 = vsel %vm873, %v865, %v870
    %v875 = vrsqrt.pop %v724
    %v876 = vmul.f32 %v875, %v724
    %v877 = vmul.f32 %v876, %v875
    %v878 = vmul.f32 0.5, %v877
    %v879 = vsub.f32 1.5, %v878
    %v880 = vmul.f32 %v875, %v879
    %vm881 = vweird.f32 %v724
    %vm882 = vweird.f32 %v875
    %vm883 = vmor %vm881, %vm882
    %v884 = vsel %vm883, %v875, %v880
    %v885 = vmul.f32 %v645, %v734
    %v886 = vmul.f32 %v646, %v744
    %v887 = vmul.f32 %v647, %v754
    %v888 = vmul.f32 %v648, %v764
    %v889 = vmul.f32 %v649, %v774
    %v890 = vmul.f32 %v650, %v784
    %v891 = vmul.f32 %v651, %v794
    %v892 = vmul.f32 %v652, %v804
    %v893 = vmul.f32 %v653, %v814
    %v894 = vmul.f32 %v654, %v824
    %v895 = vmul.f32 %v655, %v834
    %v896 = vmul.f32 %v656, %v844
    %v897 = vmul.f32 %v657, %v854
    %v898 = vmul.f32 %v658, %v864
    %v899 = vmul.f32 %v659, %v874
    %v900 = vmul.f32 %v660, %v884
    %901 = vst [vmem:[%s6] sm:$0xff] %v885
    %902 = vst [vmem:[%s6 + $0x8] sm:$0xff] %v886
    %903 = vst [vmem:[%s6 + $0x10] sm:$0xff] %v887
    %904 = vst [vmem:[%s6 + $0x18] sm:$0xff] %v888
    %905 = vst [vmem:[%s6 + $0x20] sm:$0xff] %v889
    %906 = vst [vmem:[%s6 + $0x28] sm:$0xff] %v890
    %907 = vst [vmem:[%s6 + $0x30] sm:$0xff] %v891
    %908 = vst [vmem:[%s6 + $0x38] sm:$0xff] %v892
    %909 = vst [vmem:[%s6 + $0x40] sm:$0xff] %v893
    %910 = vst [vmem:[%s6 + $0x48] sm:$0xff] %v894
    %911 = vst [vmem:[%s6 + $0x50] sm:$0xff] %v895
    %912 = vst [vmem:[%s6 + $0x58] sm:$0xff] %v896
    %913 = vst [vmem:[%s6 + $0x60] sm:$0xff] %v897
    %914 = vst [vmem:[%s6 + $0x68] sm:$0xff] %v898
    %915 = vst [vmem:[%s6 + $0x70] sm:$0xff] %v899
    %916 = vst [vmem:[%s6 + $0x78] sm:$0xff] %v900
  $region33: #{ngcf_layer_forward.3} parent=0 // pred_fallthru
    _
  // Predicated region
  $region34: #{ngcf_layer_forward.3} parent=0 // pred_check
    _
  $region35: #{ngcf_layer_forward.3} parent=0 // pred_check_branch
    %918 = sbr.rel (0) target = $region37
  $region36: #{ngcf_layer_forward.3} parent=0 // pred_region
    _
  $region37: #{ngcf_layer_forward.3} parent=0 // pred_fallthru
    _
  // Predicated region
  $region38: #{ngcf_layer_forward.3} parent=0 // pred_check
    _
  $region39: #{ngcf_layer_forward.3} parent=0 // pred_check_branch
    %920 = sbr.rel (0) target = $region41
  $region40: #{ngcf_layer_forward.3} parent=0 // pred_region
    _
  $region41: #{ngcf_layer_forward.3} parent=0 // pred_fallthru
    _

// kernel: ngcf_layer_forward.2
$region0: #{ngcf_layer_forward.2}
  #allocation0 [shape = 'u32[]', space=smem, size = 0x4, offset = 0x4, fixed_abs, tag = 'smem constant byte address 0x4 - core index']
  #allocation1 [shape = 'u32[72,128]{1,0:T(1,128)}', space=vmem, size = 0x9000, scoped, tag = 'internal scratch']
  #allocation2 [shape = 'f32[128,128]{1,0:T(8,128)}', space=vmem, size = 0x10000, scoped, tag = 'scratch operand']
  %s0 = inlined_call_operand.vmem [shape: bf16[128,128], index: 0, kind: input, shape index: {}]
  %s1 = inlined_call_operand.vmem [shape: bf16[128,128], index: 1, kind: input, shape index: {}]
  %s2 = inlined_call_operand.vmem [shape: bf16[128,128], index: 2, kind: input, shape index: {}]
  %s3 = inlined_call_operand.vmem [shape: bf16[128,128], index: 3, kind: input, shape index: {}]
  %s4 = inlined_call_operand.vmem [shape: bf16[128,128], index: 4, kind: input, shape index: {}]
  %s5 = inlined_call_operand.vmem [shape: f32[1,128], index: 5, kind: input, shape index: {}]
  %s6 = inlined_call_operand.vmem [shape: f32[128,128], index: 6, kind: output, shape index: {}]
  %s7 = sld [smem:[#allocation0]]
  $region42: #{ngcf_layer_forward.2} parent=0
    _
  %s9 = ssub.s32 1, %s7
  %s10 = scalar_select 0, %s9, %s7
  // Predicated region
  $region2: #{ngcf_layer_forward.2} parent=0 // pred_check
    _
  $region3: #{ngcf_layer_forward.2} parent=0 // pred_check_branch
    %12 = sbr.rel (0) target = $region5
  $region4: #{ngcf_layer_forward.2} parent=0 // pred_region
    _
  $region5: #{ngcf_layer_forward.2} parent=0 // pred_fallthru
    _
  // Predicated region
  $region6: #{ngcf_layer_forward.2} parent=0 // pred_check
    _
  $region7: #{ngcf_layer_forward.2} parent=0 // pred_check_branch
    %14 = sbr.rel (0) target = $region9
  $region8: #{ngcf_layer_forward.2} parent=0 // pred_region
    _
  $region9: #{ngcf_layer_forward.2} parent=0 // pred_fallthru
    _
  // Predicated region
  $region10: #{ngcf_layer_forward.2} parent=0 // pred_check
    _
  $region11: #{ngcf_layer_forward.2} parent=0 // pred_check_branch
    %16 = sbr.rel (0) target = $region13
  $region12: #{ngcf_layer_forward.2} parent=0 // pred_region
    _
  $region13: #{ngcf_layer_forward.2} parent=0 // pred_fallthru
    _
  // Predicated region
  $region14: #{ngcf_layer_forward.2} parent=0 // pred_check
    _
  $region15: #{ngcf_layer_forward.2} parent=0 // pred_check_branch
    %18 = sbr.rel (0) target = $region17
  $region16: #{ngcf_layer_forward.2} parent=0 // pred_region
    _
  $region17: #{ngcf_layer_forward.2} parent=0 // pred_fallthru
    _
  // Predicated region
  $region18: #{ngcf_layer_forward.2} parent=0 // pred_check
    _
  $region19: #{ngcf_layer_forward.2} parent=0 // pred_check_branch
    %20 = sbr.rel (0) target = $region21
  $region20: #{ngcf_layer_forward.2} parent=0 // pred_region
    _
  $region21: #{ngcf_layer_forward.2} parent=0 // pred_fallthru
    _
  // Predicated region
  $region22: #{ngcf_layer_forward.2} parent=0 // pred_check
    _
  $region23: #{ngcf_layer_forward.2} parent=0 // pred_check_branch
    %22 = sbr.rel (0) target = $region25
  $region24: #{ngcf_layer_forward.2} parent=0 // pred_region
    _
  $region25: #{ngcf_layer_forward.2} parent=0 // pred_fallthru
    _
  %p23 = scmp.eq.s32.totalorder 0, 0
  // Predicated region
  $region26: #{ngcf_layer_forward.2} parent=0 // pred_check
    %p24 = pneg %p23
  $region27: #{ngcf_layer_forward.2} parent=0 // pred_check_branch
    %26 = sbr.rel (%p24) target = $region29
  $region28: #{ngcf_layer_forward.2} parent=0 // pred_region
    %27 = vst [vmem:[#allocation2] sm:$0xff] 0.0
    %28 = vst [vmem:[#allocation2 + $0x8] sm:$0xff] 0.0
    %29 = vst [vmem:[#allocation2 + $0x10] sm:$0xff] 0.0
    %30 = vst [vmem:[#allocation2 + $0x18] sm:$0xff] 0.0
    %31 = vst [vmem:[#allocation2 + $0x20] sm:$0xff] 0.0
    %32 = vst [vmem:[#allocation2 + $0x28] sm:$0xff] 0.0
    %33 = vst [vmem:[#allocation2 + $0x30] sm:$0xff] 0.0
    %34 = vst [vmem:[#allocation2 + $0x38] sm:$0xff] 0.0
    %35 = vst [vmem:[#allocation2 + $0x40] sm:$0xff] 0.0
    %36 = vst [vmem:[#allocation2 + $0x48] sm:$0xff] 0.0
    %37 = vst [vmem:[#allocation2 + $0x50] sm:$0xff] 0.0
    %38 = vst [vmem:[#allocation2 + $0x58] sm:$0xff] 0.0
    %39 = vst [vmem:[#allocation2 + $0x60] sm:$0xff] 0.0
    %40 = vst [vmem:[#allocation2 + $0x68] sm:$0xff] 0.0
    %41 = vst [vmem:[#allocation2 + $0x70] sm:$0xff] 0.0
    %42 = vst [vmem:[#allocation2 + $0x78] sm:$0xff] 0.0
  $region29: #{ngcf_layer_forward.2} parent=0 // pred_fallthru
    _
  %v43 = vld [vmem:[#allocation2] sm:$0xff]
  %v44 = vld [vmem:[#allocation2 + $0x8] sm:$0xff]
  %v45 = vld [vmem:[#allocation2 + $0x10] sm:$0xff]
  %v46 = vld [vmem:[#allocation2 + $0x18] sm:$0xff]
  %v47 = vld [vmem:[#allocation2 + $0x20] sm:$0xff]
  %v48 = vld [vmem:[#allocation2 + $0x28] sm:$0xff]
  %v49 = vld [vmem:[#allocation2 + $0x30] sm:$0xff]
  %v50 = vld [vmem:[#allocation2 + $0x38] sm:$0xff]
  %v51 = vld [vmem:[#allocation2 + $0x40] sm:$0xff]
  %v52 = vld [vmem:[#allocation2 + $0x48] sm:$0xff]
  %v53 = vld [vmem:[#allocation2 + $0x50] sm:$0xff]
  %v54 = vld [vmem:[#allocation2 + $0x58] sm:$0xff]
  %v55 = vld [vmem:[#allocation2 + $0x60] sm:$0xff]
  %v56 = vld [vmem:[#allocation2 + $0x68] sm:$0xff]
  %v57 = vld [vmem:[#allocation2 + $0x70] sm:$0xff]
  %v58 = vld [vmem:[#allocation2 + $0x78] sm:$0xff]
  %v59 = vld [vmem:[%s1] sm:$0xf]
  %v60 = vld [vmem:[%s1 + $0x4] sm:$0xf]
  %v61 = vld [vmem:[%s1 + $0x8] sm:$0xf]
  %v62 = vld [vmem:[%s1 + $0xc] sm:$0xf]
  %v63 = vld [vmem:[%s1 + $0x10] sm:$0xf]
  %v64 = vld [vmem:[%s1 + $0x14] sm:$0xf]
  %v65 = vld [vmem:[%s1 + $0x18] sm:$0xf]
  %v66 = vld [vmem:[%s1 + $0x1c] sm:$0xf]
  %v67 = vld [vmem:[%s1 + $0x20] sm:$0xf]
  %v68 = vld [vmem:[%s1 + $0x24] sm:$0xf]
  %v69 = vld [vmem:[%s1 + $0x28] sm:$0xf]
  %v70 = vld [vmem:[%s1 + $0x2c] sm:$0xf]
  %v71 = vld [vmem:[%s1 + $0x30] sm:$0xf]
  %v72 = vld [vmem:[%s1 + $0x34] sm:$0xf]
  %v73 = vld [vmem:[%s1 + $0x38] sm:$0xf]
  %v74 = vld [vmem:[%s1 + $0x3c] sm:$0xf]
  %v75 = vld [vmem:[%s2] sm:$0xf]
  %v76 = vld [vmem:[%s2 + $0x4] sm:$0xf]
  %v77 = vld [vmem:[%s2 + $0x8] sm:$0xf]
  %v78 = vld [vmem:[%s2 + $0xc] sm:$0xf]
  %v79 = vld [vmem:[%s2 + $0x10] sm:$0xf]
  %v80 = vld [vmem:[%s2 + $0x14] sm:$0xf]
  %v81 = vld [vmem:[%s2 + $0x18] sm:$0xf]
  %v82 = vld [vmem:[%s2 + $0x1c] sm:$0xf]
  %v83 = vld [vmem:[%s2 + $0x20] sm:$0xf]
  %v84 = vld [vmem:[%s2 + $0x24] sm:$0xf]
  %v85 = vld [vmem:[%s2 + $0x28] sm:$0xf]
  %v86 = vld [vmem:[%s2 + $0x2c] sm:$0xf]
  %v87 = vld [vmem:[%s2 + $0x30] sm:$0xf]
  %v88 = vld [vmem:[%s2 + $0x34] sm:$0xf]
  %v89 = vld [vmem:[%s2 + $0x38] sm:$0xf]
  %v90 = vld [vmem:[%s2 + $0x3c] sm:$0xf]
  %v107 = vunpack.c.l.b16 %v59
  %v108 = vunpack.c.l.b16 %v60
  %v109 = vunpack.c.l.b16 %v61
  %v110 = vunpack.c.l.b16 %v62
  %v111 = vunpack.c.l.b16 %v63
  %v112 = vunpack.c.l.b16 %v64
  %v113 = vunpack.c.l.b16 %v65
  %v114 = vunpack.c.l.b16 %v66
  %v115 = vunpack.c.l.b16 %v67
  %v116 = vunpack.c.l.b16 %v68
  %v117 = vunpack.c.l.b16 %v69
  %v118 = vunpack.c.l.b16 %v70
  %v119 = vunpack.c.l.b16 %v71
  %v120 = vunpack.c.l.b16 %v72
  %v121 = vunpack.c.l.b16 %v73
  %v122 = vunpack.c.l.b16 %v74
  %v123 = vpack.c.b16 %v108, %v107
  %v124 = vpack.c.b16 %v110, %v109
  %v125 = vpack.c.b16 %v112, %v111
  %v126 = vpack.c.b16 %v114, %v113
  %v127 = vpack.c.b16 %v116, %v115
  %v128 = vpack.c.b16 %v118, %v117
  %v129 = vpack.c.b16 %v120, %v119
  %v130 = vpack.c.b16 %v122, %v121
  %v155 = vunpack.c.l.b16 %v75
  %v156 = vunpack.c.l.b16 %v76
  %v157 = vunpack.c.l.b16 %v77
  %v158 = vunpack.c.l.b16 %v78
  %v159 = vunpack.c.l.b16 %v79
  %v160 = vunpack.c.l.b16 %v80
  %v161 = vunpack.c.l.b16 %v81
  %v162 = vunpack.c.l.b16 %v82
  %v163 = vunpack.c.l.b16 %v83
  %v164 = vunpack.c.l.b16 %v84
  %v165 = vunpack.c.l.b16 %v85
  %v166 = vunpack.c.l.b16 %v86
  %v167 = vunpack.c.l.b16 %v87
  %v168 = vunpack.c.l.b16 %v88
  %v169 = vunpack.c.l.b16 %v89
  %v170 = vunpack.c.l.b16 %v90
  %v171 = vpack.c.b16 %v156, %v155
  %v172 = vpack.c.b16 %v158, %v157
  %v173 = vpack.c.b16 %v160, %v159
  %v174 = vpack.c.b16 %v162, %v161
  %v175 = vpack.c.b16 %v164, %v163
  %v176 = vpack.c.b16 %v166, %v165
  %v177 = vpack.c.b16 %v168, %v167
  %v178 = vpack.c.b16 %v170, %v169
  %187 = vmatpush.bf16.msra.mxu0 %v178
  %188 = vmatpush.bf16.msra.mxu0 %v177
  %189 = vmatpush.bf16.msra.mxu0 %v176
  %190 = vmatpush.bf16.msra.mxu0 %v175
  %191 = vmatpush.bf16.msra.mxu0 %v174
  %192 = vmatpush.bf16.msra.mxu0 %v173
  %193 = vmatpush.bf16.msra.mxu0 %v172
  %194 = vmatpush.bf16.msra.mxu0 %v171
  %195 = vmatmul.bf16.gmra.mxu0 %v123
  %v196 = vpop.f32.mrf.mxu0
  %v197 = vadd.f32 0.0, %v196
  %v198 = vpop.f32.mrf.mxu0
  %v199 = vadd.f32 0.0, %v198
  %200 = vmatmul.bf16.gmra.mxu0 %v124
  %v201 = vpop.f32.mrf.mxu0
  %v202 = vadd.f32 0.0, %v201
  %v203 = vpop.f32.mrf.mxu0
  %v204 = vadd.f32 0.0, %v203
  %205 = vmatmul.bf16.gmra.mxu0 %v125
  %v206 = vpop.f32.mrf.mxu0
  %v207 = vadd.f32 0.0, %v206
  %v208 = vpop.f32.mrf.mxu0
  %v209 = vadd.f32 0.0, %v208
  %210 = vmatmul.bf16.gmra.mxu0 %v126
  %v211 = vpop.f32.mrf.mxu0
  %v212 = vadd.f32 0.0, %v211
  %v213 = vpop.f32.mrf.mxu0
  %v214 = vadd.f32 0.0, %v213
  %215 = vmatmul.bf16.gmra.mxu0 %v127
  %v216 = vpop.f32.mrf.mxu0
  %v217 = vadd.f32 0.0, %v216
  %v218 = vpop.f32.mrf.mxu0
  %v219 = vadd.f32 0.0, %v218
  %220 = vmatmul.bf16.gmra.mxu0 %v128
  %v221 = vpop.f32.mrf.mxu0
  %v222 = vadd.f32 0.0, %v221
  %v223 = vpop.f32.mrf.mxu0
  %v224 = vadd.f32 0.0, %v223
  %225 = vmatmul.bf16.gmra.mxu0 %v129
  %v226 = vpop.f32.mrf.mxu0
  %v227 = vadd.f32 0.0, %v226
  %v228 = vpop.f32.mrf.mxu0
  %v229 = vadd.f32 0.0, %v228
  %230 = vmatmul.bf16.gmra.mxu0 %v130
  %v231 = vpop.f32.mrf.mxu0
  %v232 = vadd.f32 0.0, %v231
  %v233 = vpop.f32.mrf.mxu0
  %v234 = vadd.f32 0.0, %v233
  %235 = vdwg.mxu0
  %v236 = vadd.f32 %v43, %v197
  %v237 = vadd.f32 %v44, %v199
  %v238 = vadd.f32 %v45, %v202
  %v239 = vadd.f32 %v46, %v204
  %v240 = vadd.f32 %v47, %v207
  %v241 = vadd.f32 %v48, %v209
  %v242 = vadd.f32 %v49, %v212
  %v243 = vadd.f32 %v50, %v214
  %v244 = vadd.f32 %v51, %v217
  %v245 = vadd.f32 %v52, %v219
  %v246 = vadd.f32 %v53, %v222
  %v247 = vadd.f32 %v54, %v224
  %v248 = vadd.f32 %v55, %v227
  %v249 = vadd.f32 %v56, %v229
  %v250 = vadd.f32 %v57, %v232
  %v251 = vadd.f32 %v58, %v234
  %252 = vst [vmem:[#allocation2] sm:$0xff] %v236
  %253 = vst [vmem:[#allocation2 + $0x8] sm:$0xff] %v237
  %254 = vst [vmem:[#allocation2 + $0x10] sm:$0xff] %v238
  %255 = vst [vmem:[#allocation2 + $0x18] sm:$0xff] %v239
  %256 = vst [vmem:[#allocation2 + $0x20] sm:$0xff] %v240
  %257 = vst [vmem:[#allocation2 + $0x28] sm:$0xff] %v241
  %258 = vst [vmem:[#allocation2 + $0x30] sm:$0xff] %v242
  %259 = vst [vmem:[#allocation2 + $0x38] sm:$0xff] %v243
  %260 = vst [vmem:[#allocation2 + $0x40] sm:$0xff] %v244
  %261 = vst [vmem:[#allocation2 + $0x48] sm:$0xff] %v245
  %262 = vst [vmem:[#allocation2 + $0x50] sm:$0xff] %v246
  %263 = vst [vmem:[#allocation2 + $0x58] sm:$0xff] %v247
  %264 = vst [vmem:[#allocation2 + $0x60] sm:$0xff] %v248
  %265 = vst [vmem:[#allocation2 + $0x68] sm:$0xff] %v249
  %266 = vst [vmem:[#allocation2 + $0x70] sm:$0xff] %v250
  %267 = vst [vmem:[#allocation2 + $0x78] sm:$0xff] %v251
  // Predicated region
  $region30: #{ngcf_layer_forward.2} parent=0 // pred_check
    %p268 = pneg %p23
  $region31: #{ngcf_layer_forward.2} parent=0 // pred_check_branch
    %270 = sbr.rel (%p268) target = $region33
  $region32: #{ngcf_layer_forward.2} parent=0 // pred_region
    %v271 = vld [vmem:[%s0] sm:$0xf]
    %v272 = vld [vmem:[%s0 + $0x4] sm:$0xf]
    %v273 = vld [vmem:[%s0 + $0x8] sm:$0xf]
    %v274 = vld [vmem:[%s0 + $0xc] sm:$0xf]
    %v275 = vld [vmem:[%s0 + $0x10] sm:$0xf]
    %v276 = vld [vmem:[%s0 + $0x14] sm:$0xf]
    %v277 = vld [vmem:[%s0 + $0x18] sm:$0xf]
    %v278 = vld [vmem:[%s0 + $0x1c] sm:$0xf]
    %v279 = vld [vmem:[%s0 + $0x20] sm:$0xf]
    %v280 = vld [vmem:[%s0 + $0x24] sm:$0xf]
    %v281 = vld [vmem:[%s0 + $0x28] sm:$0xf]
    %v282 = vld [vmem:[%s0 + $0x2c] sm:$0xf]
    %v283 = vld [vmem:[%s0 + $0x30] sm:$0xf]
    %v284 = vld [vmem:[%s0 + $0x34] sm:$0xf]
    %v285 = vld [vmem:[%s0 + $0x38] sm:$0xf]
    %v286 = vld [vmem:[%s0 + $0x3c] sm:$0xf]
    %v287 = vunpack.c.l.bf16 %v271
    %v288 = vunpack.c.l.bf16 %v272
    %v289 = vunpack.c.l.bf16 %v273
    %v290 = vunpack.c.l.bf16 %v274
    %v291 = vunpack.c.l.bf16 %v275
    %v292 = vunpack.c.l.bf16 %v276
    %v293 = vunpack.c.l.bf16 %v277
    %v294 = vunpack.c.l.bf16 %v278
    %v295 = vunpack.c.l.bf16 %v279
    %v296 = vunpack.c.l.bf16 %v280
    %v297 = vunpack.c.l.bf16 %v281
    %v298 = vunpack.c.l.bf16 %v282
    %v299 = vunpack.c.l.bf16 %v283
    %v300 = vunpack.c.l.bf16 %v284
    %v301 = vunpack.c.l.bf16 %v285
    %v302 = vunpack.c.l.bf16 %v286
    %v303 = vld [vmem:[#allocation2] sm:$0xff]
    %v304 = vld [vmem:[#allocation2 + $0x8] sm:$0xff]
    %v305 = vld [vmem:[#allocation2 + $0x10] sm:$0xff]
    %v306 = vld [vmem:[#allocation2 + $0x18] sm:$0xff]
    %v307 = vld [vmem:[#allocation2 + $0x20] sm:$0xff]
    %v308 = vld [vmem:[#allocation2 + $0x28] sm:$0xff]
    %v309 = vld [vmem:[#allocation2 + $0x30] sm:$0xff]
    %v310 = vld [vmem:[#allocation2 + $0x38] sm:$0xff]
    %v311 = vld [vmem:[#allocation2 + $0x40] sm:$0xff]
    %v312 = vld [vmem:[#allocation2 + $0x48] sm:$0xff]
    %v313 = vld [vmem:[#allocation2 + $0x50] sm:$0xff]
    %v314 = vld [vmem:[#allocation2 + $0x58] sm:$0xff]
    %v315 = vld [vmem:[#allocation2 + $0x60] sm:$0xff]
    %v316 = vld [vmem:[#allocation2 + $0x68] sm:$0xff]
    %v317 = vld [vmem:[#allocation2 + $0x70] sm:$0xff]
    %v318 = vld [vmem:[#allocation2 + $0x78] sm:$0xff]
    %v319 = vadd.f32 %v287, %v303
    %v320 = vadd.f32 %v288, %v304
    %v321 = vadd.f32 %v289, %v305
    %v322 = vadd.f32 %v290, %v306
    %v323 = vadd.f32 %v291, %v307
    %v324 = vadd.f32 %v292, %v308
    %v325 = vadd.f32 %v293, %v309
    %v326 = vadd.f32 %v294, %v310
    %v327 = vadd.f32 %v295, %v311
    %v328 = vadd.f32 %v296, %v312
    %v329 = vadd.f32 %v297, %v313
    %v330 = vadd.f32 %v298, %v314
    %v331 = vadd.f32 %v299, %v315
    %v332 = vadd.f32 %v300, %v316
    %v333 = vadd.f32 %v301, %v317
    %v334 = vadd.f32 %v302, %v318
    %v335 = vpack.c.bf16 %v320, %v319
    %v336 = vpack.c.bf16 %v322, %v321
    %v337 = vpack.c.bf16 %v324, %v323
    %v338 = vpack.c.bf16 %v326, %v325
    %v339 = vpack.c.bf16 %v328, %v327
    %v340 = vpack.c.bf16 %v330, %v329
    %v341 = vpack.c.bf16 %v332, %v331
    %v342 = vpack.c.bf16 %v334, %v333
    %v343 = vmul.f32 %v287, %v303
    %v344 = vmul.f32 %v288, %v304
    %v345 = vmul.f32 %v289, %v305
    %v346 = vmul.f32 %v290, %v306
    %v347 = vmul.f32 %v291, %v307
    %v348 = vmul.f32 %v292, %v308
    %v349 = vmul.f32 %v293, %v309
    %v350 = vmul.f32 %v294, %v310
    %v351 = vmul.f32 %v295, %v311
    %v352 = vmul.f32 %v296, %v312
    %v353 = vmul.f32 %v297, %v313
    %v354 = vmul.f32 %v298, %v314
    %v355 = vmul.f32 %v299, %v315
    %v356 = vmul.f32 %v300, %v316
    %v357 = vmul.f32 %v301, %v317
    %v358 = vmul.f32 %v302, %v318
    %v359 = vpack.c.bf16 %v344, %v343
    %v360 = vpack.c.bf16 %v346, %v345
    %v361 = vpack.c.bf16 %v348, %v347
    %v362 = vpack.c.bf16 %v350, %v349
    %v363 = vpack.c.bf16 %v352, %v351
    %v364 = vpack.c.bf16 %v354, %v353
    %v365 = vpack.c.bf16 %v356, %v355
    %v366 = vpack.c.bf16 %v358, %v357
    %v367 = vld [vmem:[%s3] sm:$0xf]
    %v368 = vld [vmem:[%s3 + $0x4] sm:$0xf]
    %v369 = vld [vmem:[%s3 + $0x8] sm:$0xf]
    %v370 = vld [vmem:[%s3 + $0xc] sm:$0xf]
    %v371 = vld [vmem:[%s3 + $0x10] sm:$0xf]
    %v372 = vld [vmem:[%s3 + $0x14] sm:$0xf]
    %v373 = vld [vmem:[%s3 + $0x18] sm:$0xf]
    %v374 = vld [vmem:[%s3 + $0x1c] sm:$0xf]
    %v375 = vld [vmem:[%s3 + $0x20] sm:$0xf]
    %v376 = vld [vmem:[%s3 + $0x24] sm:$0xf]
    %v377 = vld [vmem:[%s3 + $0x28] sm:$0xf]
    %v378 = vld [vmem:[%s3 + $0x2c] sm:$0xf]
    %v379 = vld [vmem:[%s3 + $0x30] sm:$0xf]
    %v380 = vld [vmem:[%s3 + $0x34] sm:$0xf]
    %v381 = vld [vmem:[%s3 + $0x38] sm:$0xf]
    %v382 = vld [vmem:[%s3 + $0x3c] sm:$0xf]
    %v383 = vld [vmem:[%s4] sm:$0xf]
    %v384 = vld [vmem:[%s4 + $0x4] sm:$0xf]
    %v385 = vld [vmem:[%s4 + $0x8] sm:$0xf]
    %v386 = vld [vmem:[%s4 + $0xc] sm:$0xf]
    %v387 = vld [vmem:[%s4 + $0x10] sm:$0xf]
    %v388 = vld [vmem:[%s4 + $0x14] sm:$0xf]
    %v389 = vld [vmem:[%s4 + $0x18] sm:$0xf]
    %v390 = vld [vmem:[%s4 + $0x1c] sm:$0xf]
    %v391 = vld [vmem:[%s4 + $0x20] sm:$0xf]
    %v392 = vld [vmem:[%s4 + $0x24] sm:$0xf]
    %v393 = vld [vmem:[%s4 + $0x28] sm:$0xf]
    %v394 = vld [vmem:[%s4 + $0x2c] sm:$0xf]
    %v395 = vld [vmem:[%s4 + $0x30] sm:$0xf]
    %v396 = vld [vmem:[%s4 + $0x34] sm:$0xf]
    %v397 = vld [vmem:[%s4 + $0x38] sm:$0xf]
    %v398 = vld [vmem:[%s4 + $0x3c] sm:$0xf]
    %v415 = vunpack.c.l.b16 %v383
    %v416 = vunpack.c.l.b16 %v384
    %v417 = vunpack.c.l.b16 %v385
    %v418 = vunpack.c.l.b16 %v386
    %v419 = vunpack.c.l.b16 %v387
    %v420 = vunpack.c.l.b16 %v388
    %v421 = vunpack.c.l.b16 %v389
    %v422 = vunpack.c.l.b16 %v390
    %v423 = vunpack.c.l.b16 %v391
    %v424 = vunpack.c.l.b16 %v392
    %v425 = vunpack.c.l.b16 %v393
    %v426 = vunpack.c.l.b16 %v394
    %v427 = vunpack.c.l.b16 %v395
    %v428 = vunpack.c.l.b16 %v396
    %v429 = vunpack.c.l.b16 %v397
    %v430 = vunpack.c.l.b16 %v398
    %v431 = vpack.c.b16 %v416, %v415
    %v432 = vpack.c.b16 %v418, %v417
    %v433 = vpack.c.b16 %v420, %v419
    %v434 = vpack.c.b16 %v422, %v421
    %v435 = vpack.c.b16 %v424, %v423
    %v436 = vpack.c.b16 %v426, %v425
    %v437 = vpack.c.b16 %v428, %v427
    %v438 = vpack.c.b16 %v430, %v429
    %447 = vmatpush.bf16.msra.mxu0 %v438
    %448 = vmatpush.bf16.msra.mxu0 %v437
    %449 = vmatpush.bf16.msra.mxu0 %v436
    %450 = vmatpush.bf16.msra.mxu0 %v435
    %451 = vmatpush.bf16.msra.mxu0 %v434
    %452 = vmatpush.bf16.msra.mxu0 %v433
    %453 = vmatpush.bf16.msra.mxu0 %v432
    %454 = vmatpush.bf16.msra.mxu0 %v431
    %455 = vmatmul.bf16.gmra.mxu0 %v359
    %v456 = vpop.f32.mrf.mxu0
    %v457 = vadd.f32 0.0, %v456
    %v458 = vpop.f32.mrf.mxu0
    %v459 = vadd.f32 0.0, %v458
    %460 = vmatmul.bf16.gmra.mxu0 %v360
    %v461 = vpop.f32.mrf.mxu0
    %v462 = vadd.f32 0.0, %v461
    %v463 = vpop.f32.mrf.mxu0
    %v464 = vadd.f32 0.0, %v463
    %465 = vmatmul.bf16.gmra.mxu0 %v361
    %v466 = vpop.f32.mrf.mxu0
    %v467 = vadd.f32 0.0, %v466
    %v468 = vpop.f32.mrf.mxu0
    %v469 = vadd.f32 0.0, %v468
    %470 = vmatmul.bf16.gmra.mxu0 %v362
    %v471 = vpop.f32.mrf.mxu0
    %v472 = vadd.f32 0.0, %v471
    %v473 = vpop.f32.mrf.mxu0
    %v474 = vadd.f32 0.0, %v473
    %475 = vmatmul.bf16.gmra.mxu0 %v363
    %v476 = vpop.f32.mrf.mxu0
    %v477 = vadd.f32 0.0, %v476
    %v478 = vpop.f32.mrf.mxu0
    %v479 = vadd.f32 0.0, %v478
    %480 = vmatmul.bf16.gmra.mxu0 %v364
    %v481 = vpop.f32.mrf.mxu0
    %v482 = vadd.f32 0.0, %v481
    %v483 = vpop.f32.mrf.mxu0
    %v484 = vadd.f32 0.0, %v483
    %485 = vmatmul.bf16.gmra.mxu0 %v365
    %v486 = vpop.f32.mrf.mxu0
    %v487 = vadd.f32 0.0, %v486
    %v488 = vpop.f32.mrf.mxu0
    %v489 = vadd.f32 0.0, %v488
    %490 = vmatmul.bf16.gmra.mxu0 %v366
    %v491 = vpop.f32.mrf.mxu0
    %v492 = vadd.f32 0.0, %v491
    %v493 = vpop.f32.mrf.mxu0
    %v494 = vadd.f32 0.0, %v493
    %495 = vdwg.mxu0
    %v512 = vunpack.c.l.b16 %v367
    %v513 = vunpack.c.l.b16 %v368
    %v514 = vunpack.c.l.b16 %v369
    %v515 = vunpack.c.l.b16 %v370
    %v516 = vunpack.c.l.b16 %v371
    %v517 = vunpack.c.l.b16 %v372
    %v518 = vunpack.c.l.b16 %v373
    %v519 = vunpack.c.l.b16 %v374
    %v520 = vunpack.c.l.b16 %v375
    %v521 = vunpack.c.l.b16 %v376
    %v522 = vunpack.c.l.b16 %v377
    %v523 = vunpack.c.l.b16 %v378
    %v524 = vunpack.c.l.b16 %v379
    %v525 = vunpack.c.l.b16 %v380
    %v526 = vunpack.c.l.b16 %v381
    %v527 = vunpack.c.l.b16 %v382
    %v528 = vpack.c.b16 %v513, %v512
    %v529 = vpack.c.b16 %v515, %v514
    %v530 = vpack.c.b16 %v517, %v516
    %v531 = vpack.c.b16 %v519, %v518
    %v532 = vpack.c.b16 %v521, %v520
    %v533 = vpack.c.b16 %v523, %v522
    %v534 = vpack.c.b16 %v525, %v524
    %v535 = vpack.c.b16 %v527, %v526
    %544 = vmatpush.bf16.msra.mxu0 %v535
    %545 = vmatpush.bf16.msra.mxu0 %v534
    %546 = vmatpush.bf16.msra.mxu0 %v533
    %547 = vmatpush.bf16.msra.mxu0 %v532
    %548 = vmatpush.bf16.msra.mxu0 %v531
    %549 = vmatpush.bf16.msra.mxu0 %v530
    %550 = vmatpush.bf16.msra.mxu0 %v529
    %551 = vmatpush.bf16.msra.mxu0 %v528
    %552 = vmatmul.bf16.gmra.mxu0 %v335
    %v553 = vpop.f32.mrf.mxu0
    %v554 = vadd.f32 %v457, %v553
    %v555 = vpop.f32.mrf.mxu0
    %v556 = vadd.f32 %v459, %v555
    %557 = vmatmul.bf16.gmra.mxu0 %v336
    %v558 = vpop.f32.mrf.mxu0
    %v559 = vadd.f32 %v462, %v558
    %v560 = vpop.f32.mrf.mxu0
    %v561 = vadd.f32 %v464, %v560
    %562 = vmatmul.bf16.gmra.mxu0 %v337
    %v563 = vpop.f32.mrf.mxu0
    %v564 = vadd.f32 %v467, %v563
    %v565 = vpop.f32.mrf.mxu0
    %v566 = vadd.f32 %v469, %v565
    %567 = vmatmul.bf16.gmra.mxu0 %v338
    %v568 = vpop.f32.mrf.mxu0
    %v569 = vadd.f32 %v472, %v568
    %v570 = vpop.f32.mrf.mxu0
    %v571 = vadd.f32 %v474, %v570
    %572 = vmatmul.bf16.gmra.mxu0 %v339
    %v573 = vpop.f32.mrf.mxu0
    %v574 = vadd.f32 %v477, %v573
    %v575 = vpop.f32.mrf.mxu0
    %v576 = vadd.f32 %v479, %v575
    %577 = vmatmul.bf16.gmra.mxu0 %v340
    %v578 = vpop.f32.mrf.mxu0
    %v579 = vadd.f32 %v482, %v578
    %v580 = vpop.f32.mrf.mxu0
    %v581 = vadd.f32 %v484, %v580
    %582 = vmatmul.bf16.gmra.mxu0 %v341
    %v583 = vpop.f32.mrf.mxu0
    %v584 = vadd.f32 %v487, %v583
    %v585 = vpop.f32.mrf.mxu0
    %v586 = vadd.f32 %v489, %v585
    %587 = vmatmul.bf16.gmra.mxu0 %v342
    %v588 = vpop.f32.mrf.mxu0
    %v589 = vadd.f32 %v492, %v588
    %v590 = vpop.f32.mrf.mxu0
    %v591 = vadd.f32 %v494, %v590
    %592 = vdwg.mxu0
    %v593 = vld [vmem:[%s5] sm:$0x1]
    %v595 = vperm.slane %v593, 0
    %v597 = vadd.f32 %v554, %v595
    %v598 = vadd.f32 %v556, %v595
    %v599 = vadd.f32 %v559, %v595
    %v600 = vadd.f32 %v561, %v595
    %v601 = vadd.f32 %v564, %v595
    %v602 = vadd.f32 %v566, %v595
    %v603 = vadd.f32 %v569, %v595
    %v604 = vadd.f32 %v571, %v595
    %v605 = vadd.f32 %v574, %v595
    %v606 = vadd.f32 %v576, %v595
    %v607 = vadd.f32 %v579, %v595
    %v608 = vadd.f32 %v581, %v595
    %v609 = vadd.f32 %v584, %v595
    %v610 = vadd.f32 %v586, %v595
    %v611 = vadd.f32 %v589, %v595
    %v612 = vadd.f32 %v591, %v595
    %v613 = vmul.f32 %v597, 0.2
    %v614 = vmul.f32 %v598, 0.2
    %v615 = vmul.f32 %v599, 0.2
    %v616 = vmul.f32 %v600, 0.2
    %v617 = vmul.f32 %v601, 0.2
    %v618 = vmul.f32 %v602, 0.2
    %v619 = vmul.f32 %v603, 0.2
    %v620 = vmul.f32 %v604, 0.2
    %v621 = vmul.f32 %v605, 0.2
    %v622 = vmul.f32 %v606, 0.2
    %v623 = vmul.f32 %v607, 0.2
    %v624 = vmul.f32 %v608, 0.2
    %v625 = vmul.f32 %v609, 0.2
    %v626 = vmul.f32 %v610, 0.2
    %v627 = vmul.f32 %v611, 0.2
    %v628 = vmul.f32 %v612, 0.2
    %v629 = vmax.f32 %v597, %v613
    %v630 = vmax.f32 %v598, %v614
    %v631 = vmax.f32 %v599, %v615
    %v632 = vmax.f32 %v600, %v616
    %v633 = vmax.f32 %v601, %v617
    %v634 = vmax.f32 %v602, %v618
    %v635 = vmax.f32 %v603, %v619
    %v636 = vmax.f32 %v604, %v620
    %v637 = vmax.f32 %v605, %v621
    %v638 = vmax.f32 %v606, %v622
    %v639 = vmax.f32 %v607, %v623
    %v640 = vmax.f32 %v608, %v624
    %v641 = vmax.f32 %v609, %v625
    %v642 = vmax.f32 %v610, %v626
    %v643 = vmax.f32 %v611, %v627
    %v644 = vmax.f32 %v612, %v628
    %v645 = vmul.f32 %v629, %v629
    %v646 = vmul.f32 %v630, %v630
    %v647 = vmul.f32 %v631, %v631
    %v648 = vmul.f32 %v632, %v632
    %v649 = vmul.f32 %v633, %v633
    %v650 = vmul.f32 %v634, %v634
    %v651 = vmul.f32 %v635, %v635
    %v652 = vmul.f32 %v636, %v636
    %v653 = vmul.f32 %v637, %v637
    %v654 = vmul.f32 %v638, %v638
    %v655 = vmul.f32 %v639, %v639
    %v656 = vmul.f32 %v640, %v640
    %v657 = vmul.f32 %v641, %v641
    %v658 = vmul.f32 %v642, %v642
    %v659 = vmul.f32 %v643, %v643
    %v660 = vmul.f32 %v644, %v644
    %661 = vadd.xlane.f32.xlu0 %v645
    %v662 = vpop.xlane.xlu0 %661
    %663 = vadd.xlane.f32.xlu0 %v646
    %v664 = vpop.xlane.xlu0 %663
    %665 = vadd.xlane.f32.xlu0 %v647
    %v666 = vpop.xlane.xlu0 %665
    %667 = vadd.xlane.f32.xlu0 %v648
    %v668 = vpop.xlane.xlu0 %667
    %669 = vadd.xlane.f32.xlu0 %v649
    %v670 = vpop.xlane.xlu0 %669
    %671 = vadd.xlane.f32.xlu0 %v650
    %v672 = vpop.xlane.xlu0 %671
    %673 = vadd.xlane.f32.xlu0 %v651
    %v674 = vpop.xlane.xlu0 %673
    %675 = vadd.xlane.f32.xlu0 %v652
    %v676 = vpop.xlane.xlu0 %675
    %677 = vadd.xlane.f32.xlu0 %v653
    %v678 = vpop.xlane.xlu0 %677
    %679 = vadd.xlane.f32.xlu0 %v654
    %v680 = vpop.xlane.xlu0 %679
    %681 = vadd.xlane.f32.xlu0 %v655
    %v682 = vpop.xlane.xlu0 %681
    %683 = vadd.xlane.f32.xlu0 %v656
    %v684 = vpop.xlane.xlu0 %683
    %685 = vadd.xlane.f32.xlu0 %v657
    %v686 = vpop.xlane.xlu0 %685
    %687 = vadd.xlane.f32.xlu0 %v658
    %v688 = vpop.xlane.xlu0 %687
    %689 = vadd.xlane.f32.xlu0 %v659
    %v690 = vpop.xlane.xlu0 %689
    %691 = vadd.xlane.f32.xlu0 %v660
    %v692 = vpop.xlane.xlu0 %691
    %v693 = vmax.f32 %v662, 1e-24
    %v694 = vmax.f32 %v664, 1e-24
    %v695 = vmax.f32 %v666, 1e-24
    %v696 = vmax.f32 %v668, 1e-24
    %v697 = vmax.f32 %v670, 1e-24
    %v698 = vmax.f32 %v672, 1e-24
    %v699 = vmax.f32 %v674, 1e-24
    %v700 = vmax.f32 %v676, 1e-24
    %v701 = vmax.f32 %v678, 1e-24
    %v702 = vmax.f32 %v680, 1e-24
    %v703 = vmax.f32 %v682, 1e-24
    %v704 = vmax.f32 %v684, 1e-24
    %v705 = vmax.f32 %v686, 1e-24
    %v706 = vmax.f32 %v688, 1e-24
    %v707 = vmax.f32 %v690, 1e-24
    %v708 = vmax.f32 %v692, 1e-24
    %v709 = vrsqrt.pop %v693
    %v710 = vmul.f32 %v709, %v693
    %v711 = vmul.f32 %v710, %v709
    %v712 = vmul.f32 0.5, %v711
    %v713 = vsub.f32 1.5, %v712
    %v714 = vmul.f32 %v709, %v713
    %vm715 = vweird.f32 %v693
    %vm716 = vweird.f32 %v709
    %vm717 = vmor %vm715, %vm716
    %v718 = vsel %vm717, %v709, %v714
    %v719 = vrsqrt.pop %v694
    %v720 = vmul.f32 %v719, %v694
    %v721 = vmul.f32 %v720, %v719
    %v722 = vmul.f32 0.5, %v721
    %v723 = vsub.f32 1.5, %v722
    %v724 = vmul.f32 %v719, %v723
    %vm725 = vweird.f32 %v694
    %vm726 = vweird.f32 %v719
    %vm727 = vmor %vm725, %vm726
    %v728 = vsel %vm727, %v719, %v724
    %v729 = vrsqrt.pop %v695
    %v730 = vmul.f32 %v729, %v695
    %v731 = vmul.f32 %v730, %v729
    %v732 = vmul.f32 0.5, %v731
    %v733 = vsub.f32 1.5, %v732
    %v734 = vmul.f32 %v729, %v733
    %vm735 = vweird.f32 %v695
    %vm736 = vweird.f32 %v729
    %vm737 = vmor %vm735, %vm736
    %v738 = vsel %vm737, %v729, %v734
    %v739 = vrsqrt.pop %v696
    %v740 = vmul.f32 %v739, %v696
    %v741 = vmul.f32 %v740, %v739
    %v742 = vmul.f32 0.5, %v741
    %v743 = vsub.f32 1.5, %v742
    %v744 = vmul.f32 %v739, %v743
    %vm745 = vweird.f32 %v696
    %vm746 = vweird.f32 %v739
    %vm747 = vmor %vm745, %vm746
    %v748 = vsel %vm747, %v739, %v744
    %v749 = vrsqrt.pop %v697
    %v750 = vmul.f32 %v749, %v697
    %v751 = vmul.f32 %v750, %v749
    %v752 = vmul.f32 0.5, %v751
    %v753 = vsub.f32 1.5, %v752
    %v754 = vmul.f32 %v749, %v753
    %vm755 = vweird.f32 %v697
    %vm756 = vweird.f32 %v749
    %vm757 = vmor %vm755, %vm756
    %v758 = vsel %vm757, %v749, %v754
    %v759 = vrsqrt.pop %v698
    %v760 = vmul.f32 %v759, %v698
    %v761 = vmul.f32 %v760, %v759
    %v762 = vmul.f32 0.5, %v761
    %v763 = vsub.f32 1.5, %v762
    %v764 = vmul.f32 %v759, %v763
    %vm765 = vweird.f32 %v698
    %vm766 = vweird.f32 %v759
    %vm767 = vmor %vm765, %vm766
    %v768 = vsel %vm767, %v759, %v764
    %v769 = vrsqrt.pop %v699
    %v770 = vmul.f32 %v769, %v699
    %v771 = vmul.f32 %v770, %v769
    %v772 = vmul.f32 0.5, %v771
    %v773 = vsub.f32 1.5, %v772
    %v774 = vmul.f32 %v769, %v773
    %vm775 = vweird.f32 %v699
    %vm776 = vweird.f32 %v769
    %vm777 = vmor %vm775, %vm776
    %v778 = vsel %vm777, %v769, %v774
    %v779 = vrsqrt.pop %v700
    %v780 = vmul.f32 %v779, %v700
    %v781 = vmul.f32 %v780, %v779
    %v782 = vmul.f32 0.5, %v781
    %v783 = vsub.f32 1.5, %v782
    %v784 = vmul.f32 %v779, %v783
    %vm785 = vweird.f32 %v700
    %vm786 = vweird.f32 %v779
    %vm787 = vmor %vm785, %vm786
    %v788 = vsel %vm787, %v779, %v784
    %v789 = vrsqrt.pop %v701
    %v790 = vmul.f32 %v789, %v701
    %v791 = vmul.f32 %v790, %v789
    %v792 = vmul.f32 0.5, %v791
    %v793 = vsub.f32 1.5, %v792
    %v794 = vmul.f32 %v789, %v793
    %vm795 = vweird.f32 %v701
    %vm796 = vweird.f32 %v789
    %vm797 = vmor %vm795, %vm796
    %v798 = vsel %vm797, %v789, %v794
    %v799 = vrsqrt.pop %v702
    %v800 = vmul.f32 %v799, %v702
    %v801 = vmul.f32 %v800, %v799
    %v802 = vmul.f32 0.5, %v801
    %v803 = vsub.f32 1.5, %v802
    %v804 = vmul.f32 %v799, %v803
    %vm805 = vweird.f32 %v702
    %vm806 = vweird.f32 %v799
    %vm807 = vmor %vm805, %vm806
    %v808 = vsel %vm807, %v799, %v804
    %v809 = vrsqrt.pop %v703
    %v810 = vmul.f32 %v809, %v703
    %v811 = vmul.f32 %v810, %v809
    %v812 = vmul.f32 0.5, %v811
    %v813 = vsub.f32 1.5, %v812
    %v814 = vmul.f32 %v809, %v813
    %vm815 = vweird.f32 %v703
    %vm816 = vweird.f32 %v809
    %vm817 = vmor %vm815, %vm816
    %v818 = vsel %vm817, %v809, %v814
    %v819 = vrsqrt.pop %v704
    %v820 = vmul.f32 %v819, %v704
    %v821 = vmul.f32 %v820, %v819
    %v822 = vmul.f32 0.5, %v821
    %v823 = vsub.f32 1.5, %v822
    %v824 = vmul.f32 %v819, %v823
    %vm825 = vweird.f32 %v704
    %vm826 = vweird.f32 %v819
    %vm827 = vmor %vm825, %vm826
    %v828 = vsel %vm827, %v819, %v824
    %v829 = vrsqrt.pop %v705
    %v830 = vmul.f32 %v829, %v705
    %v831 = vmul.f32 %v830, %v829
    %v832 = vmul.f32 0.5, %v831
    %v833 = vsub.f32 1.5, %v832
    %v834 = vmul.f32 %v829, %v833
    %vm835 = vweird.f32 %v705
    %vm836 = vweird.f32 %v829
    %vm837 = vmor %vm835, %vm836
    %v838 = vsel %vm837, %v829, %v834
    %v839 = vrsqrt.pop %v706
    %v840 = vmul.f32 %v839, %v706
    %v841 = vmul.f32 %v840, %v839
    %v842 = vmul.f32 0.5, %v841
    %v843 = vsub.f32 1.5, %v842
    %v844 = vmul.f32 %v839, %v843
    %vm845 = vweird.f32 %v706
    %vm846 = vweird.f32 %v839
    %vm847 = vmor %vm845, %vm846
    %v848 = vsel %vm847, %v839, %v844
    %v849 = vrsqrt.pop %v707
    %v850 = vmul.f32 %v849, %v707
    %v851 = vmul.f32 %v850, %v849
    %v852 = vmul.f32 0.5, %v851
    %v853 = vsub.f32 1.5, %v852
    %v854 = vmul.f32 %v849, %v853
    %vm855 = vweird.f32 %v707
    %vm856 = vweird.f32 %v849
    %vm857 = vmor %vm855, %vm856
    %v858 = vsel %vm857, %v849, %v854
    %v859 = vrsqrt.pop %v708
    %v860 = vmul.f32 %v859, %v708
    %v861 = vmul.f32 %v860, %v859
    %v862 = vmul.f32 0.5, %v861
    %v863 = vsub.f32 1.5, %v862
    %v864 = vmul.f32 %v859, %v863
    %vm865 = vweird.f32 %v708
    %vm866 = vweird.f32 %v859
    %vm867 = vmor %vm865, %vm866
    %v868 = vsel %vm867, %v859, %v864
    %v869 = vmul.f32 %v629, %v718
    %v870 = vmul.f32 %v630, %v728
    %v871 = vmul.f32 %v631, %v738
    %v872 = vmul.f32 %v632, %v748
    %v873 = vmul.f32 %v633, %v758
    %v874 = vmul.f32 %v634, %v768
    %v875 = vmul.f32 %v635, %v778
    %v876 = vmul.f32 %v636, %v788
    %v877 = vmul.f32 %v637, %v798
    %v878 = vmul.f32 %v638, %v808
    %v879 = vmul.f32 %v639, %v818
    %v880 = vmul.f32 %v640, %v828
    %v881 = vmul.f32 %v641, %v838
    %v882 = vmul.f32 %v642, %v848
    %v883 = vmul.f32 %v643, %v858
    %v884 = vmul.f32 %v644, %v868
    %885 = vst [vmem:[%s6] sm:$0xff] %v869
    %886 = vst [vmem:[%s6 + $0x8] sm:$0xff] %v870
    %887 = vst [vmem:[%s6 + $0x10] sm:$0xff] %v871
    %888 = vst [vmem:[%s6 + $0x18] sm:$0xff] %v872
    %889 = vst [vmem:[%s6 + $0x20] sm:$0xff] %v873
    %890 = vst [vmem:[%s6 + $0x28] sm:$0xff] %v874
    %891 = vst [vmem:[%s6 + $0x30] sm:$0xff] %v875
    %892 = vst [vmem:[%s6 + $0x38] sm:$0xff] %v876
    %893 = vst [vmem:[%s6 + $0x40] sm:$0xff] %v877
    %894 = vst [vmem:[%s6 + $0x48] sm:$0xff] %v878
    %895 = vst [vmem:[%s6 + $0x50] sm:$0xff] %v879
    %896 = vst [vmem:[%s6 + $0x58] sm:$0xff] %v880
    %897 = vst [vmem:[%s6 + $0x60] sm:$0xff] %v881
    %898 = vst [vmem:[%s6 + $0x68] sm:$0xff] %v882
    %899 = vst [vmem:[%s6 + $0x70] sm:$0xff] %v883
    %900 = vst [vmem:[%s6 + $0x78] sm:$0xff] %v884
  $region33: #{ngcf_layer_forward.2} parent=0 // pred_fallthru
    _
  // Predicated region
  $region34: #{ngcf_layer_forward.2} parent=0 // pred_check
    _
  $region35: #{ngcf_layer_forward.2} parent=0 // pred_check_branch
    %902 = sbr.rel (0) target = $region37
  $region36: #{ngcf_layer_forward.2} parent=0 // pred_region
    _
  $region37: #{ngcf_layer_forward.2} parent=0 // pred_fallthru
    _
  // Predicated region
  $region38: #{ngcf_layer_forward.2} parent=0 // pred_check
    _
  $region39: #{ngcf_layer_forward.2} parent=0 // pred_check_branch
    %904 = sbr.rel (0) target = $region41
  $region40: #{ngcf_layer_forward.2} parent=0 // pred_region
    _
  $region41: #{ngcf_layer_forward.2} parent=0 // pred_fallthru
    _

</llo_original>
